<compile_context>
chip_gen: v6e
topology: v6e:2x2x1
jax: 0.10.0
libtpu: 0.0.40
codegen_flags: <defaults>
</compile_context>

<pallas_src>
import jax
import jax.numpy as jnp
from jax.experimental import pallas as pl
from jax.experimental.pallas import tpu as pltpu

INPUT_DIM = 11
FEAT_PAD = 16          # layer-1 K padded to a clean bf16 sublane pack (16 rows / vreg)
HIDDEN = (512, 256, 128, 64)
BN_EPS = 1e-5
LEAKY_SLOPE = 0.01


def cardionet_kernel(x_ref,
                     w1_ref, t1_ref,
                     w2_ref, t2_ref,
                     w3_ref, t3_ref,
                     w4_ref, t4_ref,
                     w5_ref, b5_ref,
                     o_ref):
    def hidden_layer(h, w_ref, t_ref, out_dtype):
        # Linear with the BN scale pre-folded into the bf16 weight (MXU, f32 acc);
        # epilogue = shift add + LeakyReLU(0.01) == max(z, 0.01*z) + cast (VPU).
        z = jnp.dot(w_ref[...], h, preferred_element_type=jnp.float32)   # (out, TB) f32
        z = z + t_ref[...]                                               # (out,1) lane-broadcast
        return jnp.maximum(z, LEAKY_SLOPE * z).astype(out_dtype)

    h = x_ref[...]                                          # (16, TB) bf16
    h = hidden_layer(h, w1_ref, t1_ref, jnp.bfloat16)       # (512, TB) bf16
    h = hidden_layer(h, w2_ref, t2_ref, jnp.bfloat16)       # (256, TB) bf16
    h = hidden_layer(h, w3_ref, t3_ref, jnp.bfloat16)       # (128, TB) bf16
    h = hidden_layer(h, w4_ref, t4_ref, jnp.float32)        # (64,  TB) f32 (feeds VPU, not MXU)

    # Final Linear(64 -> 1): VPU multiply + sublane reduction (avoids an N=1 MXU matmul),
    # producing a lane-dense (1, TB) row directly.
    z = jnp.sum(h * w5_ref[...], axis=0, keepdims=True) + b5_ref[0]      # (1, TB) f32
    # Sigmoid via EUP exp + approximate EUP reciprocal (keeps the VALU free).
    o_ref[...] = pl.reciprocal(1.0 + jnp.exp(-z), approx=True)


def make_params(key):
    """Deterministic parameters mimicking PyTorch layouts:
    Linear weights [out, in] with uniform(-1/sqrt(fan_in), 1/sqrt(fan_in)) init,
    BatchNorm1d with randomized (but valid) gamma/beta/running stats so the BN fold
    is actually exercised by the correctness check."""
    dims = (INPUT_DIM,) + HIDDEN + (1,)
    params = {}
    for i in range(5):
        fan_in, fan_out = dims[i], dims[i + 1]
        key, kw, kb = jax.random.split(key, 3)
        bound = float(fan_in) ** -0.5
        params[f"w{i+1}"] = jax.random.uniform(
            kw, (fan_out, fan_in), jnp.float32, -bound, bound)
        params[f"b{i+1}"] = jax.random.uniform(
            kb, (fan_out,), jnp.float32, -bound, bound)
    for i, d in enumerate(HIDDEN, start=1):
        key, k1, k2, k3, k4 = jax.random.split(key, 5)
        params[f"gamma{i}"] = jax.random.uniform(k1, (d,), jnp.float32, 0.5, 1.5)
        params[f"beta{i}"] = 0.1 * jax.random.normal(k2, (d,), jnp.float32)
        params[f"rmean{i}"] = 0.1 * jax.random.normal(k3, (d,), jnp.float32)
        params[f"rvar{i}"] = jax.random.uniform(k4, (d,), jnp.float32, 0.5, 1.5)
    return params


def _fold_layer(params, i):
    """Fold BatchNorm1d (eval) + Linear bias into the weight and a per-row shift:
         y = W x + b ;  bn(y) = s*(y - rmean) + beta,  s = gamma/sqrt(rvar+eps)
      =>  bn(y) = (s[:,None]*W) x + ((b - rmean)*s + beta)."""
    gamma, beta = params[f"gamma{i}"], params[f"beta{i}"]
    rmean, rvar = params[f"rmean{i}"], params[f"rvar{i}"]
    w, b = params[f"w{i}"], params[f"b{i}"]
    scale = gamma * jax.lax.rsqrt(rvar + BN_EPS)
    w_folded = (w * scale[:, None]).astype(jnp.bfloat16)                  # (out, in) bf16
    shift = ((b - rmean) * scale + beta).reshape(-1, 1).astype(jnp.float32)
    return w_folded, shift


def _round_up(n, m):
    return -(-n // m) * m


def cardionet_forward(x, params, *, block_batch=None):
    """x: (B, 11) float array. Returns (B, 1) float32 probabilities (eval semantics)."""
    B = x.shape[0]
    if block_batch is None:
        # Large tile to amortize the ~0.35us per-grid-step overhead, but keep >= 2 tiles
        # whenever the batch allows so v7x's two TensorCores both get a share of the
        # "parallel" grid axis; cap at 2048 to bound per-tile VMEM scratch.
        block_batch = max(128, min(2048, _round_up(pl.cdiv(B, 2), 128)))
    assert block_batch % 128 == 0, "batch tile must be a multiple of 128 (lane width)"
    num_tiles = pl.cdiv(B, block_batch)
    b_pad = num_tiles * block_batch

    # Feature-major bf16 input, features zero-padded 11 -> 16 (clean sublane pack, half
    # the DMA bytes vs f32). Padded batch lanes produce garbage that is sliced off.
    # TODO(synk): the host-side transpose is a separate (tiny) XLA op; fuse it into the
    # data producer if small-batch latency ever matters.
    x_t = jnp.pad(x.astype(jnp.bfloat16).T,
                  ((0, FEAT_PAD - INPUT_DIM), (0, b_pad - B)))

    folded = [_fold_layer(params, i) for i in range(1, 5)]
    w1, t1 = folded[0]
    w1 = jnp.pad(w1, ((0, 0), (0, FEAT_PAD - INPUT_DIM)))   # zero K-columns match x_t pad
    folded[0] = (w1, t1)

    w5_col = params["w5"].reshape(-1, 1).astype(jnp.float32)   # (64, 1) f32 (VPU path)
    b5 = params["b5"].reshape(1,).astype(jnp.float32)          # scalar -> SMEM

    args = [x_t]
    in_specs = [pl.BlockSpec((FEAT_PAD, block_batch), lambda i: (0, i))]
    for w, t in folded:
        args += [w, t]
        # Constant index maps -> weights / shifts stay VMEM-resident across the grid
        # (~350 KiB total, so double-buffering them is cheap; pl.Buffered(1) not needed).
        in_specs += [pl.BlockSpec(w.shape, lambda i: (0, 0)),
                     pl.BlockSpec(t.shape, lambda i: (0, 0))]
    args += [w5_col, b5]
    in_specs += [pl.BlockSpec(w5_col.shape, lambda i: (0, 0)),
                 pl.BlockSpec(memory_space=pltpu.MemorySpace.SMEM)]

    out = pl.pallas_call(
        cardionet_kernel,
        out_shape=jax.ShapeDtypeStruct((1, b_pad), jnp.float32),
        grid=(num_tiles,),
        in_specs=in_specs,
        out_specs=pl.BlockSpec((1, block_batch), lambda i: (0, i)),
        compiler_params=pltpu.CompilerParams(
            dimension_semantics=("parallel",),
            # Headroom for the large batch tile; matters on v5e (16 MiB scoped default),
            # still well inside v7x's 64 MiB physical VMEM.
            vmem_limit_bytes=32 * 1024 * 1024),
    )(*args)

    return out[0, :B].reshape(B, 1)


def cardionet_ref(x, params):
    """Pure-JAX f32 reference matching PyTorch eval-mode semantics."""
    h = x.astype(jnp.float32)
    for i in range(1, 5):
        z = h @ params[f"w{i}"].T + params[f"b{i}"]
        z = (z - params[f"rmean{i}"]) / jnp.sqrt(params[f"rvar{i}"] + BN_EPS)
        z = z * params[f"gamma{i}"] + params[f"beta{i}"]
        h = jnp.where(z > 0, z, LEAKY_SLOPE * z)
    z = h @ params["w5"].T + params["b5"]
    return jax.nn.sigmoid(z)


if __name__ == "__main__":
    key = jax.random.PRNGKey(0)
    kp, kx = jax.random.split(key)
    params = make_params(kp)

    # Small single-tile case (batch padded to 128).
    B = 8
    x = jax.random.normal(kx, (B, INPUT_DIM), jnp.float32)
    out = jax.block_until_ready(cardionet_forward(x, params))
    ref = cardionet_ref(x, params)
    assert out.shape == (B, 1), out.shape
    assert jnp.allclose(out, ref, atol=2e-2, rtol=2e-2), float(jnp.max(jnp.abs(out - ref)))

    # Two-tile case with batch padding (exercises the grid and resident weights).
    B2 = 200
    x2 = jax.random.normal(jax.random.PRNGKey(1), (B2, INPUT_DIM), jnp.float32)
    out2 = jax.block_until_ready(cardionet_forward(x2, params))
    ref2 = cardionet_ref(x2, params)
    assert out2.shape == (B2, 1), out2.shape
    assert jnp.allclose(out2, ref2, atol=2e-2, rtol=2e-2), float(jnp.max(jnp.abs(out2 - ref2)))

    # Larger batch: auto-picked tile (512), two tiles, padded output region sliced off.
    B3 = 1000
    x3 = jax.random.normal(jax.random.PRNGKey(2), (B3, INPUT_DIM), jnp.float32)
    out3 = jax.block_until_ready(cardionet_forward(x3, params))
    ref3 = cardionet_ref(x3, params)
    assert out3.shape == (B3, 1), out3.shape
    assert jnp.allclose(out3, ref3, atol=2e-2, rtol=2e-2), float(jnp.max(jnp.abs(out3 - ref3)))

    print("KERNEL_OK")
</pallas_src>

<mosaic_0001>
module attributes {stable_mosaic.version = 11 : i64} {
  func.func @cardionet_kernel(%arg0: i32, %arg1: memref<16x128xbf16, #tpu.memory_space<vmem>>, %arg2: memref<512x16xbf16, #tpu.memory_space<vmem>>, %arg3: memref<512x1xf32, #tpu.memory_space<vmem>>, %arg4: memref<256x512xbf16, #tpu.memory_space<vmem>>, %arg5: memref<256x1xf32, #tpu.memory_space<vmem>>, %arg6: memref<128x256xbf16, #tpu.memory_space<vmem>>, %arg7: memref<128x1xf32, #tpu.memory_space<vmem>>, %arg8: memref<64x128xbf16, #tpu.memory_space<vmem>>, %arg9: memref<64x1xf32, #tpu.memory_space<vmem>>, %arg10: memref<64x1xf32, #tpu.memory_space<vmem>>, %arg11: memref<1xf32, #tpu.memory_space<smem>>, %arg12: memref<1x128xf32, #tpu.memory_space<vmem>>) attributes {dimension_semantics = [#tpu.dimension_semantics<parallel>], iteration_bounds = array<i64: 1>, scalar_prefetch = 0 : i64, scratch_operands = 0 : i64, tpu.core_type = #tpu.core_type<tc>, window_params = [{transform_indices = @transform_0, window_bounds = array<i64: 16, 128>}, {pipeline_mode = #tpu.pipeline_mode<synchronous>, transform_indices = @transform_1, window_bounds = array<i64: 512, 16>}, {pipeline_mode = #tpu.pipeline_mode<synchronous>, transform_indices = @transform_2, window_bounds = array<i64: 512, 1>}, {pipeline_mode = #tpu.pipeline_mode<synchronous>, transform_indices = @transform_3, window_bounds = array<i64: 256, 512>}, {pipeline_mode = #tpu.pipeline_mode<synchronous>, transform_indices = @transform_4, window_bounds = array<i64: 256, 1>}, {pipeline_mode = #tpu.pipeline_mode<synchronous>, transform_indices = @transform_5, window_bounds = array<i64: 128, 256>}, {pipeline_mode = #tpu.pipeline_mode<synchronous>, transform_indices = @transform_6, window_bounds = array<i64: 128, 1>}, {pipeline_mode = #tpu.pipeline_mode<synchronous>, transform_indices = @transform_7, window_bounds = array<i64: 64, 128>}, {pipeline_mode = #tpu.pipeline_mode<synchronous>, transform_indices = @transform_8, window_bounds = array<i64: 64, 1>}, {pipeline_mode = #tpu.pipeline_mode<synchronous>, transform_indices = @transform_9, window_bounds = array<i64: 64, 1>}, {transform_indices = @transform_10, window_bounds = array<i64: 1>}, {transform_indices = @transform_11, window_bounds = array<i64: 1, 128>}]} {
    %c0 = arith.constant 0 : index
    %c0_0 = arith.constant 0 : index
    %0 = vector.load %arg1[%c0, %c0_0] : memref<16x128xbf16, #tpu.memory_space<vmem>>, vector<16x128xbf16>
    %c0_1 = arith.constant 0 : index
    %c0_2 = arith.constant 0 : index
    %1 = vector.load %arg2[%c0_1, %c0_2] : memref<512x16xbf16, #tpu.memory_space<vmem>>, vector<512x16xbf16>
    %cst = arith.constant dense<0.000000e+00> : vector<512x128xf32>
    %2 = tpu.matmul %1, %0, %cst {dimension_numbers = #tpu.dot_dimension_numbers<[1], [0], [0], [1], [0, 0, 1, 1], [], []>} : vector<512x16xbf16>, vector<16x128xbf16>, vector<512x128xf32> -> vector<512x128xf32>
    %c0_3 = arith.constant 0 : index
    %c0_4 = arith.constant 0 : index
    %3 = vector.load %arg3[%c0_3, %c0_4] : memref<512x1xf32, #tpu.memory_space<vmem>>, vector<512x1xf32>
    %4 = vector.broadcast %3 : vector<512x1xf32> to vector<512x128xf32>
    %5 = arith.addf %2, %4 : vector<512x128xf32>
    %cst_5 = arith.constant 0.00999999977 : f32
    %6 = vector.broadcast %cst_5 : f32 to vector<512x128xf32>
    %7 = arith.mulf %6, %5 : vector<512x128xf32>
    %8 = arith.maximumf %5, %7 : vector<512x128xf32>
    %9 = arith.truncf %8 : vector<512x128xf32> to vector<512x128xbf16>
    %c0_6 = arith.constant 0 : index
    %c0_7 = arith.constant 0 : index
    %10 = vector.load %arg4[%c0_6, %c0_7] : memref<256x512xbf16, #tpu.memory_space<vmem>>, vector<256x512xbf16>
    %cst_8 = arith.constant dense<0.000000e+00> : vector<256x128xf32>
    %11 = tpu.matmul %10, %9, %cst_8 {dimension_numbers = #tpu.dot_dimension_numbers<[1], [0], [0], [1], [0, 0, 1, 1], [], []>} : vector<256x512xbf16>, vector<512x128xbf16>, vector<256x128xf32> -> vector<256x128xf32>
    %c0_9 = arith.constant 0 : index
    %c0_10 = arith.constant 0 : index
    %12 = vector.load %arg5[%c0_9, %c0_10] : memref<256x1xf32, #tpu.memory_space<vmem>>, vector<256x1xf32>
    %13 = vector.broadcast %12 : vector<256x1xf32> to vector<256x128xf32>
    %14 = arith.addf %11, %13 : vector<256x128xf32>
    %cst_11 = arith.constant 0.00999999977 : f32
    %15 = vector.broadcast %cst_11 : f32 to vector<256x128xf32>
    %16 = arith.mulf %15, %14 : vector<256x128xf32>
    %17 = arith.maximumf %14, %16 : vector<256x128xf32>
    %18 = arith.truncf %17 : vector<256x128xf32> to vector<256x128xbf16>
    %c0_12 = arith.constant 0 : index
    %c0_13 = arith.constant 0 : index
    %19 = vector.load %arg6[%c0_12, %c0_13] : memref<128x256xbf16, #tpu.memory_space<vmem>>, vector<128x256xbf16>
    %cst_14 = arith.constant dense<0.000000e+00> : vector<128x128xf32>
    %20 = tpu.matmul %19, %18, %cst_14 {dimension_numbers = #tpu.dot_dimension_numbers<[1], [0], [0], [1], [0, 0, 1, 1], [], []>} : vector<128x256xbf16>, vector<256x128xbf16>, vector<128x128xf32> -> vector<128x128xf32>
    %c0_15 = arith.constant 0 : index
    %c0_16 = arith.constant 0 : index
    %21 = vector.load %arg7[%c0_15, %c0_16] : memref<128x1xf32, #tpu.memory_space<vmem>>, vector<128x1xf32>
    %22 = vector.broadcast %21 : vector<128x1xf32> to vector<128x128xf32>
    %23 = arith.addf %20, %22 : vector<128x128xf32>
    %cst_17 = arith.constant 0.00999999977 : f32
    %24 = vector.broadcast %cst_17 : f32 to vector<128x128xf32>
    %25 = arith.mulf %24, %23 : vector<128x128xf32>
    %26 = arith.maximumf %23, %25 : vector<128x128xf32>
    %27 = arith.truncf %26 : vector<128x128xf32> to vector<128x128xbf16>
    %c0_18 = arith.constant 0 : index
    %c0_19 = arith.constant 0 : index
    %28 = vector.load %arg8[%c0_18, %c0_19] : memref<64x128xbf16, #tpu.memory_space<vmem>>, vector<64x128xbf16>
    %cst_20 = arith.constant dense<0.000000e+00> : vector<64x128xf32>
    %29 = tpu.matmul %28, %27, %cst_20 {dimension_numbers = #tpu.dot_dimension_numbers<[1], [0], [0], [1], [0, 0, 1, 1], [], []>} : vector<64x128xbf16>, vector<128x128xbf16>, vector<64x128xf32> -> vector<64x128xf32>
    %c0_21 = arith.constant 0 : index
    %c0_22 = arith.constant 0 : index
    %30 = vector.load %arg9[%c0_21, %c0_22] : memref<64x1xf32, #tpu.memory_space<vmem>>, vector<64x1xf32>
    %31 = vector.broadcast %30 : vector<64x1xf32> to vector<64x128xf32>
    %32 = arith.addf %29, %31 : vector<64x128xf32>
    %cst_23 = arith.constant 0.00999999977 : f32
    %33 = vector.broadcast %cst_23 : f32 to vector<64x128xf32>
    %34 = arith.mulf %33, %32 : vector<64x128xf32>
    %35 = arith.maximumf %32, %34 : vector<64x128xf32>
    %c0_24 = arith.constant 0 : index
    %c0_25 = arith.constant 0 : index
    %36 = vector.load %arg10[%c0_24, %c0_25] : memref<64x1xf32, #tpu.memory_space<vmem>>, vector<64x1xf32>
    %37 = vector.broadcast %36 : vector<64x1xf32> to vector<64x128xf32>
    %38 = arith.mulf %35, %37 : vector<64x128xf32>
    %cst_26 = arith.constant dense<0.000000e+00> : vector<128xf32>
    %39 = vector.multi_reduction <add>, %38, %cst_26 [0] : vector<64x128xf32> to vector<128xf32>
    %40 = vector.shape_cast %39 : vector<128xf32> to vector<1x128xf32>
    %c0_27 = arith.constant 0 : index
    %41 = memref.load %arg11[%c0_27] : memref<1xf32, #tpu.memory_space<smem>>
    %42 = vector.broadcast %41 : f32 to vector<1x128xf32>
    %43 = arith.addf %40, %42 : vector<1x128xf32>
    %cst_28 = arith.constant 0.000000e+00 : f32
    %44 = vector.broadcast %cst_28 : f32 to vector<1x128xf32>
    %45 = arith.subf %44, %43 : vector<1x128xf32>
    %46 = math.exp %45 : vector<1x128xf32>
    %cst_29 = arith.constant 1.000000e+00 : f32
    %47 = vector.broadcast %cst_29 : f32 to vector<1x128xf32>
    %48 = arith.addf %47, %46 : vector<1x128xf32>
    %49 = tpu.reciprocal %48 {approx = true} : vector<1x128xf32> -> vector<1x128xf32>
    %c0_30 = arith.constant 0 : index
    %c0_31 = arith.constant 0 : index
    %50 = vector.load %arg12[%c0_30, %c0_31] : memref<1x128xf32, #tpu.memory_space<vmem>>, vector<1x128xf32>
    tpu.vector_store %arg12[%c0_30, %c0_31], %49 {strides = array<i32>} : memref<1x128xf32, #tpu.memory_space<vmem>>, vector<1x128xf32>,
    return
  }
  func.func @transform_0(%arg0: i32) -> (i32, i32) {
    %c0_i32 = arith.constant 0 : i32
    %c0_i32_0 = arith.constant 0 : i32
    return %c0_i32, %arg0 : i32, i32
  }
  func.func @transform_1(%arg0: i32) -> (i32, i32) {
    %c0_i32 = arith.constant 0 : i32
    %c0_i32_0 = arith.constant 0 : i32
    %c0_i32_1 = arith.constant 0 : i32
    return %c0_i32, %c0_i32_0 : i32, i32
  }
  func.func @transform_2(%arg0: i32) -> (i32, i32) {
    %c0_i32 = arith.constant 0 : i32
    %c0_i32_0 = arith.constant 0 : i32
    %c0_i32_1 = arith.constant 0 : i32
    return %c0_i32, %c0_i32_0 : i32, i32
  }
  func.func @transform_3(%arg0: i32) -> (i32, i32) {
    %c0_i32 = arith.constant 0 : i32
    %c0_i32_0 = arith.constant 0 : i32
    %c0_i32_1 = arith.constant 0 : i32
    return %c0_i32, %c0_i32_0 : i32, i32
  }
  func.func @transform_4(%arg0: i32) -> (i32, i32) {
    %c0_i32 = arith.constant 0 : i32
    %c0_i32_0 = arith.constant 0 : i32
    %c0_i32_1 = arith.constant 0 : i32
    return %c0_i32, %c0_i32_0 : i32, i32
  }
  func.func @transform_5(%arg0: i32) -> (i32, i32) {
    %c0_i32 = arith.constant 0 : i32
    %c0_i32_0 = arith.constant 0 : i32
    %c0_i32_1 = arith.constant 0 : i32
    return %c0_i32, %c0_i32_0 : i32, i32
  }
  func.func @transform_6(%arg0: i32) -> (i32, i32) {
    %c0_i32 = arith.constant 0 : i32
    %c0_i32_0 = arith.constant 0 : i32
    %c0_i32_1 = arith.constant 0 : i32
    return %c0_i32, %c0_i32_0 : i32, i32
  }
  func.func @transform_7(%arg0: i32) -> (i32, i32) {
    %c0_i32 = arith.constant 0 : i32
    %c0_i32_0 = arith.constant 0 : i32
    %c0_i32_1 = arith.constant 0 : i32
    return %c0_i32, %c0_i32_0 : i32, i32
  }
  func.func @transform_8(%arg0: i32) -> (i32, i32) {
    %c0_i32 = arith.constant 0 : i32
    %c0_i32_0 = arith.constant 0 : i32
    %c0_i32_1 = arith.constant 0 : i32
    return %c0_i32, %c0_i32_0 : i32, i32
  }
  func.func @transform_9(%arg0: i32) -> (i32, i32) {
    %c0_i32 = arith.constant 0 : i32
    %c0_i32_0 = arith.constant 0 : i32
    %c0_i32_1 = arith.constant 0 : i32
    return %c0_i32, %c0_i32_0 : i32, i32
  }
  func.func @transform_10(%arg0: i32) -> i32 {
    %c0_i32 = arith.constant 0 : i32
    %c0_i32_0 = arith.constant 0 : i32
    return %c0_i32 : i32
  }
  func.func @transform_11(%arg0: i32) -> (i32, i32) {
    %c0_i32 = arith.constant 0 : i32
    %c0_i32_0 = arith.constant 0 : i32
    return %c0_i32, %arg0 : i32, i32
  }
}

</mosaic_0001>

<llo_original>
// kernel: tpu_custom_call.1
$region0: #{tpu_custom_call.1}
  #allocation0 [shape = 'u32[]', space=smem, size = 0x4, offset = 0x4, fixed_abs, tag = 'smem constant byte address 0x4 - core index']
  #allocation1 [shape = 'u32[144,128]{1,0:T(1,128)}', space=vmem, size = 0x12000, scoped, tag = 'internal scratch']
  #allocation2 [shape = 'f32[1]{0:T(128)S(6)}', space=smem, size = 0x200, scoped, tag = 'scoped memory for tpu_custom_call.1']
  %s0 = inlined_call_operand.vmem [shape: bf16[16,128], index: 0, kind: input, shape index: {}]
  %s1 = inlined_call_operand.vmem [shape: bf16[512,16], index: 1, kind: input, shape index: {}]
  %s2 = inlined_call_operand.vmem [shape: f32[512,1], index: 2, kind: input, shape index: {}]
  %s3 = inlined_call_operand.vmem [shape: bf16[256,512], index: 3, kind: input, shape index: {}]
  %s4 = inlined_call_operand.vmem [shape: f32[256,1], index: 4, kind: input, shape index: {}]
  %s5 = inlined_call_operand.vmem [shape: bf16[128,256], index: 5, kind: input, shape index: {}]
  %s6 = inlined_call_operand.vmem [shape: f32[128,1], index: 6, kind: input, shape index: {}]
  %s7 = inlined_call_operand.vmem [shape: bf16[64,128], index: 7, kind: input, shape index: {}]
  %s8 = inlined_call_operand.vmem [shape: f32[64,1], index: 8, kind: input, shape index: {}]
  %s9 = inlined_call_operand.vmem [shape: f32[64,1], index: 9, kind: input, shape index: {}]
  %s10 = inlined_call_operand.<no memory space> [shape: f32[1], index: 10, kind: input, shape index: {}]
  %s11 = inlined_call_operand.hbm [shape: f32[1,128], index: 11, kind: output, shape index: {}]
  %s12 = sld [smem:[#allocation0]]
  $region54: #{tpu_custom_call.1} parent=0
    _
  %s14 = ssub.s32 1, %s12
  %s15 = scalar_select 0, %s14, %s12
  %16 = sst [smem:[#allocation2]] %s10
  $region1: #{tpu_custom_call.1} parent=0
    #allocation3 [shape = 'u8[512]{0}', space=vmem, size = 0x400, scoped, tag = 'output window, operand 0, single buffered']
    #allocation4 [shape = 's32[1]{0}', space=sflag, size = 0x4, scoped, tag = 'scoped memory for tpu_custom_call.1']
    %17 = vsyncpa [#allocation4], 0
    // Predicated region
    $region2: #{tpu_custom_call.1} parent=1 // pred_check
      _
    $region3: #{tpu_custom_call.1} parent=1 // pred_check_branch
      %19 = sbr.rel (0) target = $region5
    $region4: #{tpu_custom_call.1} parent=1 // pred_region
      _
    $region5: #{tpu_custom_call.1} parent=1 // pred_fallthru
      _
    // Predicated region
    $region6: #{tpu_custom_call.1} parent=1 // pred_check
      _
    $region7: #{tpu_custom_call.1} parent=1 // pred_check_branch
      %21 = sbr.rel (0) target = $region9
    $region8: #{tpu_custom_call.1} parent=1 // pred_region
      _
    $region9: #{tpu_custom_call.1} parent=1 // pred_fallthru
      _
    // Predicated region
    $region10: #{tpu_custom_call.1} parent=1 // pred_check
      _
    $region11: #{tpu_custom_call.1} parent=1 // pred_check_branch
      %23 = sbr.rel (0) target = $region13
    $region12: #{tpu_custom_call.1} parent=1 // pred_region
      _
    $region13: #{tpu_custom_call.1} parent=1 // pred_fallthru
      _
    // Predicated region
    $region14: #{tpu_custom_call.1} parent=1 // pred_check
      _
    $region15: #{tpu_custom_call.1} parent=1 // pred_check_branch
      %25 = sbr.rel (0) target = $region17
    $region16: #{tpu_custom_call.1} parent=1 // pred_region
      _
    $region17: #{tpu_custom_call.1} parent=1 // pred_fallthru
      _
    // Predicated region
    $region18: #{tpu_custom_call.1} parent=1 // pred_check
      _
    $region19: #{tpu_custom_call.1} parent=1 // pred_check_branch
      %27 = sbr.rel (0) target = $region21
    $region20: #{tpu_custom_call.1} parent=1 // pred_region
      _
    $region21: #{tpu_custom_call.1} parent=1 // pred_fallthru
      _
    // Predicated region
    $region22: #{tpu_custom_call.1} parent=1 // pred_check
      _
    $region23: #{tpu_custom_call.1} parent=1 // pred_check_branch
      %29 = sbr.rel (0) target = $region25
    $region24: #{tpu_custom_call.1} parent=1 // pred_region
      _
    $region25: #{tpu_custom_call.1} parent=1 // pred_fallthru
      _
    // Predicated region
    $region26: #{tpu_custom_call.1} parent=1 // pred_check
      _
    $region27: #{tpu_custom_call.1} parent=1 // pred_check_branch
      %31 = sbr.rel (0) target = $region29
    $region28: #{tpu_custom_call.1} parent=1 // pred_region
      _
    $region29: #{tpu_custom_call.1} parent=1 // pred_fallthru
      _
    // Predicated region
    $region30: #{tpu_custom_call.1} parent=1 // pred_check
      _
    $region31: #{tpu_custom_call.1} parent=1 // pred_check_branch
      %33 = sbr.rel (0) target = $region33
    $region32: #{tpu_custom_call.1} parent=1 // pred_region
      _
    $region33: #{tpu_custom_call.1} parent=1 // pred_fallthru
      _
    // Predicated region
    $region34: #{tpu_custom_call.1} parent=1 // pred_check
      _
    $region35: #{tpu_custom_call.1} parent=1 // pred_check_branch
      %35 = sbr.rel (0) target = $region37
    $region36: #{tpu_custom_call.1} parent=1 // pred_region
      _
    $region37: #{tpu_custom_call.1} parent=1 // pred_fallthru
      _
    // Predicated region
    $region38: #{tpu_custom_call.1} parent=1 // pred_check
      _
    $region39: #{tpu_custom_call.1} parent=1 // pred_check_branch
      %37 = sbr.rel (0) target = $region41
    $region40: #{tpu_custom_call.1} parent=1 // pred_region
      _
    $region41: #{tpu_custom_call.1} parent=1 // pred_fallthru
      _
    // Predicated region
    $region42: #{tpu_custom_call.1} parent=1 // pred_check
      _
    $region43: #{tpu_custom_call.1} parent=1 // pred_check_branch
      %39 = sbr.rel (0) target = $region45
    $region44: #{tpu_custom_call.1} parent=1 // pred_region
      _
    $region45: #{tpu_custom_call.1} parent=1 // pred_fallthru
      _
    %v41 = vld [vmem:[%s0] sm:$0xf]
    %v42 = vld [vmem:[%s0 + $0x4] sm:$0xf]
    %v43 = vld [vmem:[%s1] sm:$0xf]
    %v44 = vld [vmem:[%s1 + $0x4] sm:$0xf]
    %v45 = vld [vmem:[%s1 + $0x8] sm:$0xf]
    %v46 = vld [vmem:[%s1 + $0xc] sm:$0xf]
    %v47 = vld [vmem:[%s1 + $0x10] sm:$0xf]
    %v48 = vld [vmem:[%s1 + $0x14] sm:$0xf]
    %v49 = vld [vmem:[%s1 + $0x18] sm:$0xf]
    %v50 = vld [vmem:[%s1 + $0x1c] sm:$0xf]
    %v51 = vld [vmem:[%s1 + $0x20] sm:$0xf]
    %v52 = vld [vmem:[%s1 + $0x24] sm:$0xf]
    %v53 = vld [vmem:[%s1 + $0x28] sm:$0xf]
    %v54 = vld [vmem:[%s1 + $0x2c] sm:$0xf]
    %v55 = vld [vmem:[%s1 + $0x30] sm:$0xf]
    %v56 = vld [vmem:[%s1 + $0x34] sm:$0xf]
    %v57 = vld [vmem:[%s1 + $0x38] sm:$0xf]
    %v58 = vld [vmem:[%s1 + $0x3c] sm:$0xf]
    %v59 = vld [vmem:[%s1 + $0x40] sm:$0xf]
    %v60 = vld [vmem:[%s1 + $0x44] sm:$0xf]
    %v61 = vld [vmem:[%s1 + $0x48] sm:$0xf]
    %v62 = vld [vmem:[%s1 + $0x4c] sm:$0xf]
    %v63 = vld [vmem:[%s1 + $0x50] sm:$0xf]
    %v64 = vld [vmem:[%s1 + $0x54] sm:$0xf]
    %v65 = vld [vmem:[%s1 + $0x58] sm:$0xf]
    %v66 = vld [vmem:[%s1 + $0x5c] sm:$0xf]
    %v67 = vld [vmem:[%s1 + $0x60] sm:$0xf]
    %v68 = vld [vmem:[%s1 + $0x64] sm:$0xf]
    %v69 = vld [vmem:[%s1 + $0x68] sm:$0xf]
    %v70 = vld [vmem:[%s1 + $0x6c] sm:$0xf]
    %v71 = vld [vmem:[%s1 + $0x70] sm:$0xf]
    %v72 = vld [vmem:[%s1 + $0x74] sm:$0xf]
    %v73 = vld [vmem:[%s1 + $0x78] sm:$0xf]
    %v74 = vld [vmem:[%s1 + $0x7c] sm:$0xf]
    %v75 = vld [vmem:[%s1 + $0x80] sm:$0xf]
    %v76 = vld [vmem:[%s1 + $0x84] sm:$0xf]
    %v77 = vld [vmem:[%s1 + $0x88] sm:$0xf]
    %v78 = vld [vmem:[%s1 + $0x8c] sm:$0xf]
    %v79 = vld [vmem:[%s1 + $0x90] sm:$0xf]
    %v80 = vld [vmem:[%s1 + $0x94] sm:$0xf]
    %v81 = vld [vmem:[%s1 + $0x98] sm:$0xf]
    %v82 = vld [vmem:[%s1 + $0x9c] sm:$0xf]
    %v83 = vld [vmem:[%s1 + $0xa0] sm:$0xf]
    %v84 = vld [vmem:[%s1 + $0xa4] sm:$0xf]
    %v85 = vld [vmem:[%s1 + $0xa8] sm:$0xf]
    %v86 = vld [vmem:[%s1 + $0xac] sm:$0xf]
    %v87 = vld [vmem:[%s1 + $0xb0] sm:$0xf]
    %v88 = vld [vmem:[%s1 + $0xb4] sm:$0xf]
    %v89 = vld [vmem:[%s1 + $0xb8] sm:$0xf]
    %v90 = vld [vmem:[%s1 + $0xbc] sm:$0xf]
    %v91 = vld [vmem:[%s1 + $0xc0] sm:$0xf]
    %v92 = vld [vmem:[%s1 + $0xc4] sm:$0xf]
    %v93 = vld [vmem:[%s1 + $0xc8] sm:$0xf]
    %v94 = vld [vmem:[%s1 + $0xcc] sm:$0xf]
    %v95 = vld [vmem:[%s1 + $0xd0] sm:$0xf]
    %v96 = vld [vmem:[%s1 + $0xd4] sm:$0xf]
    %v97 = vld [vmem:[%s1 + $0xd8] sm:$0xf]
    %v98 = vld [vmem:[%s1 + $0xdc] sm:$0xf]
    %v99 = vld [vmem:[%s1 + $0xe0] sm:$0xf]
    %v100 = vld [vmem:[%s1 + $0xe4] sm:$0xf]
    %v101 = vld [vmem:[%s1 + $0xe8] sm:$0xf]
    %v102 = vld [vmem:[%s1 + $0xec] sm:$0xf]
    %v103 = vld [vmem:[%s1 + $0xf0] sm:$0xf]
    %v104 = vld [vmem:[%s1 + $0xf4] sm:$0xf]
    %v105 = vld [vmem:[%s1 + $0xf8] sm:$0xf]
    %v106 = vld [vmem:[%s1 + $0xfc] sm:$0xf]
    %v107 = vld [vmem:[%s2] sm:$0xff]
    %v108 = vld [vmem:[%s2 + $0x8] sm:$0xff]
    %v109 = vld [vmem:[%s2 + $0x10] sm:$0xff]
    %v110 = vld [vmem:[%s2 + $0x18] sm:$0xff]
    %v111 = vld [vmem:[%s2 + $0x20] sm:$0xff]
    %v112 = vld [vmem:[%s2 + $0x28] sm:$0xff]
    %v113 = vld [vmem:[%s2 + $0x30] sm:$0xff]
    %v114 = vld [vmem:[%s2 + $0x38] sm:$0xff]
    %v115 = vld [vmem:[%s2 + $0x40] sm:$0xff]
    %v116 = vld [vmem:[%s2 + $0x48] sm:$0xff]
    %v117 = vld [vmem:[%s2 + $0x50] sm:$0xff]
    %v118 = vld [vmem:[%s2 + $0x58] sm:$0xff]
    %v119 = vld [vmem:[%s2 + $0x60] sm:$0xff]
    %v120 = vld [vmem:[%s2 + $0x68] sm:$0xff]
    %v121 = vld [vmem:[%s2 + $0x70] sm:$0xff]
    %v122 = vld [vmem:[%s2 + $0x78] sm:$0xff]
    %v123 = vld [vmem:[%s2 + $0x80] sm:$0xff]
    %v124 = vld [vmem:[%s2 + $0x88] sm:$0xff]
    %v125 = vld [vmem:[%s2 + $0x90] sm:$0xff]
    %v126 = vld [vmem:[%s2 + $0x98] sm:$0xff]
    %v127 = vld [vmem:[%s2 + $0xa0] sm:$0xff]
    %v128 = vld [vmem:[%s2 + $0xa8] sm:$0xff]
    %v129 = vld [vmem:[%s2 + $0xb0] sm:$0xff]
    %v130 = vld [vmem:[%s2 + $0xb8] sm:$0xff]
    %v131 = vld [vmem:[%s2 + $0xc0] sm:$0xff]
    %v132 = vld [vmem:[%s2 + $0xc8] sm:$0xff]
    %v133 = vld [vmem:[%s2 + $0xd0] sm:$0xff]
    %v134 = vld [vmem:[%s2 + $0xd8] sm:$0xff]
    %v135 = vld [vmem:[%s2 + $0xe0] sm:$0xff]
    %v136 = vld [vmem:[%s2 + $0xe8] sm:$0xff]
    %v137 = vld [vmem:[%s2 + $0xf0] sm:$0xff]
    %v138 = vld [vmem:[%s2 + $0xf8] sm:$0xff]
    %v139 = vld [vmem:[%s2 + $0x100] sm:$0xff]
    %v140 = vld [vmem:[%s2 + $0x108] sm:$0xff]
    %v141 = vld [vmem:[%s2 + $0x110] sm:$0xff]
    %v142 = vld [vmem:[%s2 + $0x118] sm:$0xff]
    %v143 = vld [vmem:[%s2 + $0x120] sm:$0xff]
    %v144 = vld [vmem:[%s2 + $0x128] sm:$0xff]
    %v145 = vld [vmem:[%s2 + $0x130] sm:$0xff]
    %v146 = vld [vmem:[%s2 + $0x138] sm:$0xff]
    %v147 = vld [vmem:[%s2 + $0x140] sm:$0xff]
    %v148 = vld [vmem:[%s2 + $0x148] sm:$0xff]
    %v149 = vld [vmem:[%s2 + $0x150] sm:$0xff]
    %v150 = vld [vmem:[%s2 + $0x158] sm:$0xff]
    %v151 = vld [vmem:[%s2 + $0x160] sm:$0xff]
    %v152 = vld [vmem:[%s2 + $0x168] sm:$0xff]
    %v153 = vld [vmem:[%s2 + $0x170] sm:$0xff]
    %v154 = vld [vmem:[%s2 + $0x178] sm:$0xff]
    %v155 = vld [vmem:[%s2 + $0x180] sm:$0xff]
    %v156 = vld [vmem:[%s2 + $0x188] sm:$0xff]
    %v157 = vld [vmem:[%s2 + $0x190] sm:$0xff]
    %v158 = vld [vmem:[%s2 + $0x198] sm:$0xff]
    %v159 = vld [vmem:[%s2 + $0x1a0] sm:$0xff]
    %v160 = vld [vmem:[%s2 + $0x1a8] sm:$0xff]
    %v161 = vld [vmem:[%s2 + $0x1b0] sm:$0xff]
    %v162 = vld [vmem:[%s2 + $0x1b8] sm:$0xff]
    %v163 = vld [vmem:[%s2 + $0x1c0] sm:$0xff]
    %v164 = vld [vmem:[%s2 + $0x1c8] sm:$0xff]
    %v165 = vld [vmem:[%s2 + $0x1d0] sm:$0xff]
    %v166 = vld [vmem:[%s2 + $0x1d8] sm:$0xff]
    %v167 = vld [vmem:[%s2 + $0x1e0] sm:$0xff]
    %v168 = vld [vmem:[%s2 + $0x1e8] sm:$0xff]
    %v169 = vld [vmem:[%s2 + $0x1f0] sm:$0xff]
    %v170 = vld [vmem:[%s2 + $0x1f8] sm:$0xff]
    %172 = vset.pattern.permute.xlu0 0
    %173 = vperm.xlu0 %172, %v107
    %v174 = vpop.permute.xlu0 %173
    %177 = vset.pattern.permute.xlu0 0
    %178 = vperm.xlu0 %177, %v108
    %v179 = vpop.permute.xlu0 %178
    %182 = vset.pattern.permute.xlu0 0
    %183 = vperm.xlu0 %182, %v109
    %v184 = vpop.permute.xlu0 %183
    %187 = vset.pattern.permute.xlu0 0
    %188 = vperm.xlu0 %187, %v110
    %v189 = vpop.permute.xlu0 %188
    %192 = vset.pattern.permute.xlu0 0
    %193 = vperm.xlu0 %192, %v111
    %v194 = vpop.permute.xlu0 %193
    %197 = vset.pattern.permute.xlu0 0
    %198 = vperm.xlu0 %197, %v112
    %v199 = vpop.permute.xlu0 %198
    %202 = vset.pattern.permute.xlu0 0
    %203 = vperm.xlu0 %202, %v113
    %v204 = vpop.permute.xlu0 %203
    %207 = vset.pattern.permute.xlu0 0
    %208 = vperm.xlu0 %207, %v114
    %v209 = vpop.permute.xlu0 %208
    %212 = vset.pattern.permute.xlu0 0
    %213 = vperm.xlu0 %212, %v115
    %v214 = vpop.permute.xlu0 %213
    %217 = vset.pattern.permute.xlu0 0
    %218 = vperm.xlu0 %217, %v116
    %v219 = vpop.permute.xlu0 %218
    %222 = vset.pattern.permute.xlu0 0
    %223 = vperm.xlu0 %222, %v117
    %v224 = vpop.permute.xlu0 %223
    %227 = vset.pattern.permute.xlu0 0
    %228 = vperm.xlu0 %227, %v118
    %v229 = vpop.permute.xlu0 %228
    %232 = vset.pattern.permute.xlu0 0
    %233 = vperm.xlu0 %232, %v119
    %v234 = vpop.permute.xlu0 %233
    %237 = vset.pattern.permute.xlu0 0
    %238 = vperm.xlu0 %237, %v120
    %v239 = vpop.permute.xlu0 %238
    %242 = vset.pattern.permute.xlu0 0
    %243 = vperm.xlu0 %242, %v121
    %v244 = vpop.permute.xlu0 %243
    %247 = vset.pattern.permute.xlu0 0
    %248 = vperm.xlu0 %247, %v122
    %v249 = vpop.permute.xlu0 %248
    %252 = vset.pattern.permute.xlu0 0
    %253 = vperm.xlu0 %252, %v123
    %v254 = vpop.permute.xlu0 %253
    %257 = vset.pattern.permute.xlu0 0
    %258 = vperm.xlu0 %257, %v124
    %v259 = vpop.permute.xlu0 %258
    %262 = vset.pattern.permute.xlu0 0
    %263 = vperm.xlu0 %262, %v125
    %v264 = vpop.permute.xlu0 %263
    %267 = vset.pattern.permute.xlu0 0
    %268 = vperm.xlu0 %267, %v126
    %v269 = vpop.permute.xlu0 %268
    %272 = vset.pattern.permute.xlu0 0
    %273 = vperm.xlu0 %272, %v127
    %v274 = vpop.permute.xlu0 %273
    %277 = vset.pattern.permute.xlu0 0
    %278 = vperm.xlu0 %277, %v128
    %v279 = vpop.permute.xlu0 %278
    %282 = vset.pattern.permute.xlu0 0
    %283 = vperm.xlu0 %282, %v129
    %v284 = vpop.permute.xlu0 %283
    %287 = vset.pattern.permute.xlu0 0
    %288 = vperm.xlu0 %287, %v130
    %v289 = vpop.permute.xlu0 %288
    %292 = vset.pattern.permute.xlu0 0
    %293 = vperm.xlu0 %292, %v131
    %v294 = vpop.permute.xlu0 %293
    %297 = vset.pattern.permute.xlu0 0
    %298 = vperm.xlu0 %297, %v132
    %v299 = vpop.permute.xlu0 %298
    %302 = vset.pattern.permute.xlu0 0
    %303 = vperm.xlu0 %302, %v133
    %v304 = vpop.permute.xlu0 %303
    %307 = vset.pattern.permute.xlu0 0
    %308 = vperm.xlu0 %307, %v134
    %v309 = vpop.permute.xlu0 %308
    %312 = vset.pattern.permute.xlu0 0
    %313 = vperm.xlu0 %312, %v135
    %v314 = vpop.permute.xlu0 %313
    %317 = vset.pattern.permute.xlu0 0
    %318 = vperm.xlu0 %317, %v136
    %v319 = vpop.permute.xlu0 %318
    %322 = vset.pattern.permute.xlu0 0
    %323 = vperm.xlu0 %322, %v137
    %v324 = vpop.permute.xlu0 %323
    %327 = vset.pattern.permute.xlu0 0
    %328 = vperm.xlu0 %327, %v138
    %v329 = vpop.permute.xlu0 %328
    %332 = vset.pattern.permute.xlu0 0
    %333 = vperm.xlu0 %332, %v139
    %v334 = vpop.permute.xlu0 %333
    %337 = vset.pattern.permute.xlu0 0
    %338 = vperm.xlu0 %337, %v140
    %v339 = vpop.permute.xlu0 %338
    %342 = vset.pattern.permute.xlu0 0
    %343 = vperm.xlu0 %342, %v141
    %v344 = vpop.permute.xlu0 %343
    %347 = vset.pattern.permute.xlu0 0
    %348 = vperm.xlu0 %347, %v142
    %v349 = vpop.permute.xlu0 %348
    %352 = vset.pattern.permute.xlu0 0
    %353 = vperm.xlu0 %352, %v143
    %v354 = vpop.permute.xlu0 %353
    %357 = vset.pattern.permute.xlu0 0
    %358 = vperm.xlu0 %357, %v144
    %v359 = vpop.permute.xlu0 %358
    %362 = vset.pattern.permute.xlu0 0
    %363 = vperm.xlu0 %362, %v145
    %v364 = vpop.permute.xlu0 %363
    %367 = vset.pattern.permute.xlu0 0
    %368 = vperm.xlu0 %367, %v146
    %v369 = vpop.permute.xlu0 %368
    %372 = vset.pattern.permute.xlu0 0
    %373 = vperm.xlu0 %372, %v147
    %v374 = vpop.permute.xlu0 %373
    %377 = vset.pattern.permute.xlu0 0
    %378 = vperm.xlu0 %377, %v148
    %v379 = vpop.permute.xlu0 %378
    %382 = vset.pattern.permute.xlu0 0
    %383 = vperm.xlu0 %382, %v149
    %v384 = vpop.permute.xlu0 %383
    %387 = vset.pattern.permute.xlu0 0
    %388 = vperm.xlu0 %387, %v150
    %v389 = vpop.permute.xlu0 %388
    %392 = vset.pattern.permute.xlu0 0
    %393 = vperm.xlu0 %392, %v151
    %v394 = vpop.permute.xlu0 %393
    %397 = vset.pattern.permute.xlu0 0
    %398 = vperm.xlu0 %397, %v152
    %v399 = vpop.permute.xlu0 %398
    %402 = vset.pattern.permute.xlu0 0
    %403 = vperm.xlu0 %402, %v153
    %v404 = vpop.permute.xlu0 %403
    %407 = vset.pattern.permute.xlu0 0
    %408 = vperm.xlu0 %407, %v154
    %v409 = vpop.permute.xlu0 %408
    %412 = vset.pattern.permute.xlu0 0
    %413 = vperm.xlu0 %412, %v155
    %v414 = vpop.permute.xlu0 %413
    %417 = vset.pattern.permute.xlu0 0
    %418 = vperm.xlu0 %417, %v156
    %v419 = vpop.permute.xlu0 %418
    %422 = vset.pattern.permute.xlu0 0
    %423 = vperm.xlu0 %422, %v157
    %v424 = vpop.permute.xlu0 %423
    %427 = vset.pattern.permute.xlu0 0
    %428 = vperm.xlu0 %427, %v158
    %v429 = vpop.permute.xlu0 %428
    %432 = vset.pattern.permute.xlu0 0
    %433 = vperm.xlu0 %432, %v159
    %v434 = vpop.permute.xlu0 %433
    %437 = vset.pattern.permute.xlu0 0
    %438 = vperm.xlu0 %437, %v160
    %v439 = vpop.permute.xlu0 %438
    %442 = vset.pattern.permute.xlu0 0
    %443 = vperm.xlu0 %442, %v161
    %v444 = vpop.permute.xlu0 %443
    %447 = vset.pattern.permute.xlu0 0
    %448 = vperm.xlu0 %447, %v162
    %v449 = vpop.permute.xlu0 %448
    %452 = vset.pattern.permute.xlu0 0
    %453 = vperm.xlu0 %452, %v163
    %v454 = vpop.permute.xlu0 %453
    %457 = vset.pattern.permute.xlu0 0
    %458 = vperm.xlu0 %457, %v164
    %v459 = vpop.permute.xlu0 %458
    %462 = vset.pattern.permute.xlu0 0
    %463 = vperm.xlu0 %462, %v165
    %v464 = vpop.permute.xlu0 %463
    %467 = vset.pattern.permute.xlu0 0
    %468 = vperm.xlu0 %467, %v166
    %v469 = vpop.permute.xlu0 %468
    %472 = vset.pattern.permute.xlu0 0
    %473 = vperm.xlu0 %472, %v167
    %v474 = vpop.permute.xlu0 %473
    %477 = vset.pattern.permute.xlu0 0
    %478 = vperm.xlu0 %477, %v168
    %v479 = vpop.permute.xlu0 %478
    %482 = vset.pattern.permute.xlu0 0
    %483 = vperm.xlu0 %482, %v169
    %v484 = vpop.permute.xlu0 %483
    %487 = vset.pattern.permute.xlu0 0
    %488 = vperm.xlu0 %487, %v170
    %v489 = vpop.permute.xlu0 %488
    %v555 = vunpack.c.l.b16 %v43
    %v556 = vunpack.c.l.b16 %v44
    %v557 = vunpack.c.l.b16 %v45
    %v558 = vunpack.c.l.b16 %v46
    %v559 = vunpack.c.l.b16 %v47
    %v560 = vunpack.c.l.b16 %v48
    %v561 = vunpack.c.l.b16 %v49
    %v562 = vunpack.c.l.b16 %v50
    %v563 = vunpack.c.l.b16 %v51
    %v564 = vunpack.c.l.b16 %v52
    %v565 = vunpack.c.l.b16 %v53
    %v566 = vunpack.c.l.b16 %v54
    %v567 = vunpack.c.l.b16 %v55
    %v568 = vunpack.c.l.b16 %v56
    %v569 = vunpack.c.l.b16 %v57
    %v570 = vunpack.c.l.b16 %v58
    %v571 = vunpack.c.l.b16 %v59
    %v572 = vunpack.c.l.b16 %v60
    %v573 = vunpack.c.l.b16 %v61
    %v574 = vunpack.c.l.b16 %v62
    %v575 = vunpack.c.l.b16 %v63
    %v576 = vunpack.c.l.b16 %v64
    %v577 = vunpack.c.l.b16 %v65
    %v578 = vunpack.c.l.b16 %v66
    %v579 = vunpack.c.l.b16 %v67
    %v580 = vunpack.c.l.b16 %v68
    %v581 = vunpack.c.l.b16 %v69
    %v582 = vunpack.c.l.b16 %v70
    %v583 = vunpack.c.l.b16 %v71
    %v584 = vunpack.c.l.b16 %v72
    %v585 = vunpack.c.l.b16 %v73
    %v586 = vunpack.c.l.b16 %v74
    %v587 = vunpack.c.l.b16 %v75
    %v588 = vunpack.c.l.b16 %v76
    %v589 = vunpack.c.l.b16 %v77
    %v590 = vunpack.c.l.b16 %v78
    %v591 = vunpack.c.l.b16 %v79
    %v592 = vunpack.c.l.b16 %v80
    %v593 = vunpack.c.l.b16 %v81
    %v594 = vunpack.c.l.b16 %v82
    %v595 = vunpack.c.l.b16 %v83
    %v596 = vunpack.c.l.b16 %v84
    %v597 = vunpack.c.l.b16 %v85
    %v598 = vunpack.c.l.b16 %v86
    %v599 = vunpack.c.l.b16 %v87
    %v600 = vunpack.c.l.b16 %v88
    %v601 = vunpack.c.l.b16 %v89
    %v602 = vunpack.c.l.b16 %v90
    %v603 = vunpack.c.l.b16 %v91
    %v604 = vunpack.c.l.b16 %v92
    %v605 = vunpack.c.l.b16 %v93
    %v606 = vunpack.c.l.b16 %v94
    %v607 = vunpack.c.l.b16 %v95
    %v608 = vunpack.c.l.b16 %v96
    %v609 = vunpack.c.l.b16 %v97
    %v610 = vunpack.c.l.b16 %v98
    %v611 = vunpack.c.l.b16 %v99
    %v612 = vunpack.c.l.b16 %v100
    %v613 = vunpack.c.l.b16 %v101
    %v614 = vunpack.c.l.b16 %v102
    %v615 = vunpack.c.l.b16 %v103
    %v616 = vunpack.c.l.b16 %v104
    %v617 = vunpack.c.l.b16 %v105
    %v618 = vunpack.c.l.b16 %v106
    %v619 = vpack.c.b16 %v556, %v555
    %v620 = vpack.c.b16 %v558, %v557
    %v621 = vpack.c.b16 %v560, %v559
    %v622 = vpack.c.b16 %v562, %v561
    %v623 = vpack.c.b16 %v564, %v563
    %v624 = vpack.c.b16 %v566, %v565
    %v625 = vpack.c.b16 %v568, %v567
    %v626 = vpack.c.b16 %v570, %v569
    %v627 = vpack.c.b16 %v572, %v571
    %v628 = vpack.c.b16 %v574, %v573
    %v629 = vpack.c.b16 %v576, %v575
    %v630 = vpack.c.b16 %v578, %v577
    %v631 = vpack.c.b16 %v580, %v579
    %v632 = vpack.c.b16 %v582, %v581
    %v633 = vpack.c.b16 %v584, %v583
    %v634 = vpack.c.b16 %v586, %v585
    %v635 = vpack.c.b16 %v588, %v587
    %v636 = vpack.c.b16 %v590, %v589
    %v637 = vpack.c.b16 %v592, %v591
    %v638 = vpack.c.b16 %v594, %v593
    %v639 = vpack.c.b16 %v596, %v595
    %v640 = vpack.c.b16 %v598, %v597
    %v641 = vpack.c.b16 %v600, %v599
    %v642 = vpack.c.b16 %v602, %v601
    %v643 = vpack.c.b16 %v604, %v603
    %v644 = vpack.c.b16 %v606, %v605
    %v645 = vpack.c.b16 %v608, %v607
    %v646 = vpack.c.b16 %v610, %v609
    %v647 = vpack.c.b16 %v612, %v611
    %v648 = vpack.c.b16 %v614, %v613
    %v649 = vpack.c.b16 %v616, %v615
    %v650 = vpack.c.b16 %v618, %v617
    %v653 = vunpack.c.l.b16 %v41
    %v654 = vunpack.c.l.b16 %v42
    %v655 = vpack.c.b16 %v654, %v653
    %vm657 = vcmask 130048
    %v659 = vsel %vm657, %v619, 0
    %v662 = vsel %vm657, %v620, 0
    %v665 = vsel %vm657, %v621, 0
    %v668 = vsel %vm657, %v622, 0
    %v671 = vsel %vm657, %v623, 0
    %v674 = vsel %vm657, %v624, 0
    %v677 = vsel %vm657, %v625, 0
    %v680 = vsel %vm657, %v626, 0
    %v683 = vsel %vm657, %v627, 0
    %v686 = vsel %vm657, %v628, 0
    %v689 = vsel %vm657, %v629, 0
    %v692 = vsel %vm657, %v630, 0
    %v695 = vsel %vm657, %v631, 0
    %v698 = vsel %vm657, %v632, 0
    %v701 = vsel %vm657, %v633, 0
    %v704 = vsel %vm657, %v634, 0
    %v707 = vsel %vm657, %v635, 0
    %v710 = vsel %vm657, %v636, 0
    %v713 = vsel %vm657, %v637, 0
    %v716 = vsel %vm657, %v638, 0
    %v719 = vsel %vm657, %v639, 0
    %v722 = vsel %vm657, %v640, 0
    %v725 = vsel %vm657, %v641, 0
    %v728 = vsel %vm657, %v642, 0
    %v731 = vsel %vm657, %v643, 0
    %v734 = vsel %vm657, %v644, 0
    %v737 = vsel %vm657, %v645, 0
    %v740 = vsel %vm657, %v646, 0
    %v743 = vsel %vm657, %v647, 0
    %v746 = vsel %vm657, %v648, 0
    %v749 = vsel %vm657, %v649, 0
    %v752 = vsel %vm657, %v650, 0
    %754 = vmatprep.subr.bf16.mxu0 0
    %755 = vmatpush1.bf16.msra.mxu0 0
    %756 = vmatprep.subr.bf16.mxu0 0
    %757 = vmatpush1.bf16.msra.mxu0 0
    %758 = vmatprep.subr.bf16.mxu0 0
    %759 = vmatpush1.bf16.msra.mxu0 0
    %760 = vmatprep.subr.bf16.mxu0 0
    %761 = vmatpush1.bf16.msra.mxu0 0
    %762 = vmatprep.subr.bf16.mxu0 0
    %763 = vmatpush1.bf16.msra.mxu0 0
    %764 = vmatprep.subr.bf16.mxu0 0
    %765 = vmatpush1.bf16.msra.mxu0 0
    %766 = vmatprep.subr.bf16.mxu0 0
    %767 = vmatpush1.bf16.msra.mxu0 0
    %768 = vmatprep.subr.bf16.mxu0 0
    %769 = vmatpush1.bf16.msra.mxu0 %v655
    %770 = vmatprep.subr.bf16.mxu0 0
    %771 = vmatpush2.bf16.msra.mxu0 0
    %772 = vmatprep.subr.bf16.mxu0 0
    %773 = vmatpush2.bf16.msra.mxu0 0
    %774 = vmatprep.subr.bf16.mxu0 0
    %775 = vmatpush2.bf16.msra.mxu0 0
    %776 = vmatprep.subr.bf16.mxu0 0
    %777 = vmatpush2.bf16.msra.mxu0 0
    %778 = vmatprep.subr.bf16.mxu0 0
    %779 = vmatpush2.bf16.msra.mxu0 0
    %780 = vmatprep.subr.bf16.mxu0 0
    %781 = vmatpush2.bf16.msra.mxu0 0
    %782 = vmatprep.subr.bf16.mxu0 0
    %783 = vmatpush2.bf16.msra.mxu0 0
    %784 = vmatprep.subr.bf16.mxu0 0
    %785 = vmatpush2.bf16.msra.mxu0 0
    %786 = vmatprep.mubr.bf16.mxu0 0
    %787 = vmatmul.mubr.bf16.gmra.mxu0 %v659
    %v788 = vpop.f32.mrf.mxu0
    %v789 = vadd.f32 %v174, %v788
    %v790 = vpop.f32.mrf.mxu0
    %v791 = vpop.f32.mrf.mxu0
    %v792 = vadd.f32 %v179, %v791
    %v793 = vpop.f32.mrf.mxu0
    %794 = vmatprep.mubr.bf16.mxu0 0
    %795 = vmatmul.mubr.bf16.gmra.mxu0 %v662
    %v796 = vpop.f32.mrf.mxu0
    %v797 = vadd.f32 %v184, %v796
    %v798 = vpop.f32.mrf.mxu0
    %v799 = vpop.f32.mrf.mxu0
    %v800 = vadd.f32 %v189, %v799
    %v801 = vpop.f32.mrf.mxu0
    %802 = vmatprep.mubr.bf16.mxu0 0
    %803 = vmatmul.mubr.bf16.gmra.mxu0 %v665
    %v804 = vpop.f32.mrf.mxu0
    %v805 = vadd.f32 %v194, %v804
    %v806 = vpop.f32.mrf.mxu0
    %v807 = vpop.f32.mrf.mxu0
    %v808 = vadd.f32 %v199, %v807
    %v809 = vpop.f32.mrf.mxu0
    %810 = vmatprep.mubr.bf16.mxu0 0
    %811 = vmatmul.mubr.bf16.gmra.mxu0 %v668
    %v812 = vpop.f32.mrf.mxu0
    %v813 = vadd.f32 %v204, %v812
    %v814 = vpop.f32.mrf.mxu0
    %v815 = vpop.f32.mrf.mxu0
    %v816 = vadd.f32 %v209, %v815
    %v817 = vpop.f32.mrf.mxu0
    %818 = vmatprep.mubr.bf16.mxu0 0
    %819 = vmatmul.mubr.bf16.gmra.mxu0 %v671
    %v820 = vpop.f32.mrf.mxu0
    %v821 = vadd.f32 %v214, %v820
    %v822 = vpop.f32.mrf.mxu0
    %v823 = vpop.f32.mrf.mxu0
    %v824 = vadd.f32 %v219, %v823
    %v825 = vpop.f32.mrf.mxu0
    %826 = vmatprep.mubr.bf16.mxu0 0
    %827 = vmatmul.mubr.bf16.gmra.mxu0 %v674
    %v828 = vpop.f32.mrf.mxu0
    %v829 = vadd.f32 %v224, %v828
    %v830 = vpop.f32.mrf.mxu0
    %v831 = vpop.f32.mrf.mxu0
    %v832 = vadd.f32 %v229, %v831
    %v833 = vpop.f32.mrf.mxu0
    %834 = vmatprep.mubr.bf16.mxu0 0
    %835 = vmatmul.mubr.bf16.gmra.mxu0 %v677
    %v836 = vpop.f32.mrf.mxu0
    %v837 = vadd.f32 %v234, %v836
    %v838 = vpop.f32.mrf.mxu0
    %v839 = vpop.f32.mrf.mxu0
    %v840 = vadd.f32 %v239, %v839
    %v841 = vpop.f32.mrf.mxu0
    %842 = vmatprep.mubr.bf16.mxu0 0
    %843 = vmatmul.mubr.bf16.gmra.mxu0 %v680
    %v844 = vpop.f32.mrf.mxu0
    %v845 = vadd.f32 %v244, %v844
    %v846 = vpop.f32.mrf.mxu0
    %v847 = vpop.f32.mrf.mxu0
    %v848 = vadd.f32 %v249, %v847
    %v849 = vpop.f32.mrf.mxu0
    %850 = vmatprep.mubr.bf16.mxu0 0
    %851 = vmatmul.mubr.bf16.gmra.mxu0 %v683
    %v852 = vpop.f32.mrf.mxu0
    %v853 = vadd.f32 %v254, %v852
    %v854 = vpop.f32.mrf.mxu0
    %v855 = vpop.f32.mrf.mxu0
    %v856 = vadd.f32 %v259, %v855
    %v857 = vpop.f32.mrf.mxu0
    %858 = vmatprep.mubr.bf16.mxu0 0
    %859 = vmatmul.mubr.bf16.gmra.mxu0 %v686
    %v860 = vpop.f32.mrf.mxu0
    %v861 = vadd.f32 %v264, %v860
    %v862 = vpop.f32.mrf.mxu0
    %v863 = vpop.f32.mrf.mxu0
    %v864 = vadd.f32 %v269, %v863
    %v865 = vpop.f32.mrf.mxu0
    %866 = vmatprep.mubr.bf16.mxu0 0
    %867 = vmatmul.mubr.bf16.gmra.mxu0 %v689
    %v868 = vpop.f32.mrf.mxu0
    %v869 = vadd.f32 %v274, %v868
    %v870 = vpop.f32.mrf.mxu0
    %v871 = vpop.f32.mrf.mxu0
    %v872 = vadd.f32 %v279, %v871
    %v873 = vpop.f32.mrf.mxu0
    %874 = vmatprep.mubr.bf16.mxu0 0
    %875 = vmatmul.mubr.bf16.gmra.mxu0 %v692
    %v876 = vpop.f32.mrf.mxu0
    %v877 = vadd.f32 %v284, %v876
    %v878 = vpop.f32.mrf.mxu0
    %v879 = vpop.f32.mrf.mxu0
    %v880 = vadd.f32 %v289, %v879
    %v881 = vpop.f32.mrf.mxu0
    %882 = vmatprep.mubr.bf16.mxu0 0
    %883 = vmatmul.mubr.bf16.gmra.mxu0 %v695
    %v884 = vpop.f32.mrf.mxu0
    %v885 = vadd.f32 %v294, %v884
    %v886 = vpop.f32.mrf.mxu0
    %v887 = vpop.f32.mrf.mxu0
    %v888 = vadd.f32 %v299, %v887
    %v889 = vpop.f32.mrf.mxu0
    %890 = vmatprep.mubr.bf16.mxu0 0
    %891 = vmatmul.mubr.bf16.gmra.mxu0 %v698
    %v892 = vpop.f32.mrf.mxu0
    %v893 = vadd.f32 %v304, %v892
    %v894 = vpop.f32.mrf.mxu0
    %v895 = vpop.f32.mrf.mxu0
    %v896 = vadd.f32 %v309, %v895
    %v897 = vpop.f32.mrf.mxu0
    %898 = vmatprep.mubr.bf16.mxu0 0
    %899 = vmatmul.mubr.bf16.gmra.mxu0 %v701
    %v900 = vpop.f32.mrf.mxu0
    %v901 = vadd.f32 %v314, %v900
    %v902 = vpop.f32.mrf.mxu0
    %v903 = vpop.f32.mrf.mxu0
    %v904 = vadd.f32 %v319, %v903
    %v905 = vpop.f32.mrf.mxu0
    %906 = vmatprep.mubr.bf16.mxu0 0
    %907 = vmatmul.mubr.bf16.gmra.mxu0 %v704
    %v908 = vpop.f32.mrf.mxu0
    %v909 = vadd.f32 %v324, %v908
    %v910 = vpop.f32.mrf.mxu0
    %v911 = vpop.f32.mrf.mxu0
    %v912 = vadd.f32 %v329, %v911
    %v913 = vpop.f32.mrf.mxu0
    %914 = vmatprep.mubr.bf16.mxu0 0
    %915 = vmatmul.mubr.bf16.gmra.mxu0 %v707
    %v916 = vpop.f32.mrf.mxu0
    %v917 = vadd.f32 %v334, %v916
    %v918 = vpop.f32.mrf.mxu0
    %v919 = vpop.f32.mrf.mxu0
    %v920 = vadd.f32 %v339, %v919
    %v921 = vpop.f32.mrf.mxu0
    %922 = vmatprep.mubr.bf16.mxu0 0
    %923 = vmatmul.mubr.bf16.gmra.mxu0 %v710
    %v924 = vpop.f32.mrf.mxu0
    %v925 = vadd.f32 %v344, %v924
    %v926 = vpop.f32.mrf.mxu0
    %v927 = vpop.f32.mrf.mxu0
    %v928 = vadd.f32 %v349, %v927
    %v929 = vpop.f32.mrf.mxu0
    %930 = vmatprep.mubr.bf16.mxu0 0
    %931 = vmatmul.mubr.bf16.gmra.mxu0 %v713
    %v932 = vpop.f32.mrf.mxu0
    %v933 = vadd.f32 %v354, %v932
    %v934 = vpop.f32.mrf.mxu0
    %v935 = vpop.f32.mrf.mxu0
    %v936 = vadd.f32 %v359, %v935
    %v937 = vpop.f32.mrf.mxu0
    %938 = vmatprep.mubr.bf16.mxu0 0
    %939 = vmatmul.mubr.bf16.gmra.mxu0 %v716
    %v940 = vpop.f32.mrf.mxu0
    %v941 = vadd.f32 %v364, %v940
    %v942 = vpop.f32.mrf.mxu0
    %v943 = vpop.f32.mrf.mxu0
    %v944 = vadd.f32 %v369, %v943
    %v945 = vpop.f32.mrf.mxu0
    %946 = vmatprep.mubr.bf16.mxu0 0
    %947 = vmatmul.mubr.bf16.gmra.mxu0 %v719
    %v948 = vpop.f32.mrf.mxu0
    %v949 = vadd.f32 %v374, %v948
    %v950 = vpop.f32.mrf.mxu0
    %v951 = vpop.f32.mrf.mxu0
    %v952 = vadd.f32 %v379, %v951
    %v953 = vpop.f32.mrf.mxu0
    %954 = vmatprep.mubr.bf16.mxu0 0
    %955 = vmatmul.mubr.bf16.gmra.mxu0 %v722
    %v956 = vpop.f32.mrf.mxu0
    %v957 = vadd.f32 %v384, %v956
    %v958 = vpop.f32.mrf.mxu0
    %v959 = vpop.f32.mrf.mxu0
    %v960 = vadd.f32 %v389, %v959
    %v961 = vpop.f32.mrf.mxu0
    %962 = vmatprep.mubr.bf16.mxu0 0
    %963 = vmatmul.mubr.bf16.gmra.mxu0 %v725
    %v964 = vpop.f32.mrf.mxu0
    %v965 = vadd.f32 %v394, %v964
    %v966 = vpop.f32.mrf.mxu0
    %v967 = vpop.f32.mrf.mxu0
    %v968 = vadd.f32 %v399, %v967
    %v969 = vpop.f32.mrf.mxu0
    %970 = vmatprep.mubr.bf16.mxu0 0
    %971 = vmatmul.mubr.bf16.gmra.mxu0 %v728
    %v972 = vpop.f32.mrf.mxu0
    %v973 = vadd.f32 %v404, %v972
    %v974 = vpop.f32.mrf.mxu0
    %v975 = vpop.f32.mrf.mxu0
    %v976 = vadd.f32 %v409, %v975
    %v977 = vpop.f32.mrf.mxu0
    %978 = vmatprep.mubr.bf16.mxu0 0
    %979 = vmatmul.mubr.bf16.gmra.mxu0 %v731
    %v980 = vpop.f32.mrf.mxu0
    %v981 = vadd.f32 %v414, %v980
    %v982 = vpop.f32.mrf.mxu0
    %v983 = vpop.f32.mrf.mxu0
    %v984 = vadd.f32 %v419, %v983
    %v985 = vpop.f32.mrf.mxu0
    %986 = vmatprep.mubr.bf16.mxu0 0
    %987 = vmatmul.mubr.bf16.gmra.mxu0 %v734
    %v988 = vpop.f32.mrf.mxu0
    %v989 = vadd.f32 %v424, %v988
    %v990 = vpop.f32.mrf.mxu0
    %v991 = vpop.f32.mrf.mxu0
    %v992 = vadd.f32 %v429, %v991
    %v993 = vpop.f32.mrf.mxu0
    %994 = vmatprep.mubr.bf16.mxu0 0
    %995 = vmatmul.mubr.bf16.gmra.mxu0 %v737
    %v996 = vpop.f32.mrf.mxu0
    %v997 = vadd.f32 %v434, %v996
    %v998 = vpop.f32.mrf.mxu0
    %v999 = vpop.f32.mrf.mxu0
    %v1000 = vadd.f32 %v439, %v999
    %v1001 = vpop.f32.mrf.mxu0
    %1002 = vmatprep.mubr.bf16.mxu0 0
    %1003 = vmatmul.mubr.bf16.gmra.mxu0 %v740
    %v1004 = vpop.f32.mrf.mxu0
    %v1005 = vadd.f32 %v444, %v1004
    %v1006 = vpop.f32.mrf.mxu0
    %v1007 = vpop.f32.mrf.mxu0
    %v1008 = vadd.f32 %v449, %v1007
    %v1009 = vpop.f32.mrf.mxu0
    %1010 = vmatprep.mubr.bf16.mxu0 0
    %1011 = vmatmul.mubr.bf16.gmra.mxu0 %v743
    %v1012 = vpop.f32.mrf.mxu0
    %v1013 = vadd.f32 %v454, %v1012
    %v1014 = vpop.f32.mrf.mxu0
    %v1015 = vpop.f32.mrf.mxu0
    %v1016 = vadd.f32 %v459, %v1015
    %v1017 = vpop.f32.mrf.mxu0
    %1018 = vmatprep.mubr.bf16.mxu0 0
    %1019 = vmatmul.mubr.bf16.gmra.mxu0 %v746
    %v1020 = vpop.f32.mrf.mxu0
    %v1021 = vadd.f32 %v464, %v1020
    %v1022 = vpop.f32.mrf.mxu0
    %v1023 = vpop.f32.mrf.mxu0
    %v1024 = vadd.f32 %v469, %v1023
    %v1025 = vpop.f32.mrf.mxu0
    %1026 = vmatprep.mubr.bf16.mxu0 0
    %1027 = vmatmul.mubr.bf16.gmra.mxu0 %v749
    %v1028 = vpop.f32.mrf.mxu0
    %v1029 = vadd.f32 %v474, %v1028
    %v1030 = vpop.f32.mrf.mxu0
    %v1031 = vpop.f32.mrf.mxu0
    %v1032 = vadd.f32 %v479, %v1031
    %v1033 = vpop.f32.mrf.mxu0
    %1034 = vmatprep.mubr.bf16.mxu0 0
    %1035 = vmatmul.mubr.bf16.gmra.mxu0 %v752
    %v1036 = vpop.f32.mrf.mxu0
    %v1037 = vadd.f32 %v484, %v1036
    %v1038 = vpop.f32.mrf.mxu0
    %v1039 = vpop.f32.mrf.mxu0
    %v1040 = vadd.f32 %v489, %v1039
    %v1041 = vpop.f32.mrf.mxu0
    %1042 = vdwg.mxu0
    %v1043 = vmul.f32 %v789, 0.01
    %v1044 = vmul.f32 %v792, 0.01
    %v1045 = vmul.f32 %v797, 0.01
    %v1046 = vmul.f32 %v800, 0.01
    %v1047 = vmul.f32 %v805, 0.01
    %v1048 = vmul.f32 %v808, 0.01
    %v1049 = vmul.f32 %v813, 0.01
    %v1050 = vmul.f32 %v816, 0.01
    %v1051 = vmul.f32 %v821, 0.01
    %v1052 = vmul.f32 %v824, 0.01
    %v1053 = vmul.f32 %v829, 0.01
    %v1054 = vmul.f32 %v832, 0.01
    %v1055 = vmul.f32 %v837, 0.01
    %v1056 = vmul.f32 %v840, 0.01
    %v1057 = vmul.f32 %v845, 0.01
    %v1058 = vmul.f32 %v848, 0.01
    %v1059 = vmul.f32 %v853, 0.01
    %v1060 = vmul.f32 %v856, 0.01
    %v1061 = vmul.f32 %v861, 0.01
    %v1062 = vmul.f32 %v864, 0.01
    %v1063 = vmul.f32 %v869, 0.01
    %v1064 = vmul.f32 %v872, 0.01
    %v1065 = vmul.f32 %v877, 0.01
    %v1066 = vmul.f32 %v880, 0.01
    %v1067 = vmul.f32 %v885, 0.01
    %v1068 = vmul.f32 %v888, 0.01
    %v1069 = vmul.f32 %v893, 0.01
    %v1070 = vmul.f32 %v896, 0.01
    %v1071 = vmul.f32 %v901, 0.01
    %v1072 = vmul.f32 %v904, 0.01
    %v1073 = vmul.f32 %v909, 0.01
    %v1074 = vmul.f32 %v912, 0.01
    %v1075 = vmul.f32 %v917, 0.01
    %v1076 = vmul.f32 %v920, 0.01
    %v1077 = vmul.f32 %v925, 0.01
    %v1078 = vmul.f32 %v928, 0.01
    %v1079 = vmul.f32 %v933, 0.01
    %v1080 = vmul.f32 %v936, 0.01
    %v1081 = vmul.f32 %v941, 0.01
    %v1082 = vmul.f32 %v944, 0.01
    %v1083 = vmul.f32 %v949, 0.01
    %v1084 = vmul.f32 %v952, 0.01
    %v1085 = vmul.f32 %v957, 0.01
    %v1086 = vmul.f32 %v960, 0.01
    %v1087 = vmul.f32 %v965, 0.01
    %v1088 = vmul.f32 %v968, 0.01
    %v1089 = vmul.f32 %v973, 0.01
    %v1090 = vmul.f32 %v976, 0.01
    %v1091 = vmul.f32 %v981, 0.01
    %v1092 = vmul.f32 %v984, 0.01
    %v1093 = vmul.f32 %v989, 0.01
    %v1094 = vmul.f32 %v992, 0.01
    %v1095 = vmul.f32 %v997, 0.01
    %v1096 = vmul.f32 %v1000, 0.01
    %v1097 = vmul.f32 %v1005, 0.01
    %v1098 = vmul.f32 %v1008, 0.01
    %v1099 = vmul.f32 %v1013, 0.01
    %v1100 = vmul.f32 %v1016, 0.01
    %v1101 = vmul.f32 %v1021, 0.01
    %v1102 = vmul.f32 %v1024, 0.01
    %v1103 = vmul.f32 %v1029, 0.01
    %v1104 = vmul.f32 %v1032, 0.01
    %v1105 = vmul.f32 %v1037, 0.01
    %v1106 = vmul.f32 %v1040, 0.01
    %v1107 = vmax.f32 %v789, %v1043
    %v1108 = vmax.f32 %v792, %v1044
    %v1109 = vmax.f32 %v797, %v1045
    %v1110 = vmax.f32 %v800, %v1046
    %v1111 = vmax.f32 %v805, %v1047
    %v1112 = vmax.f32 %v808, %v1048
    %v1113 = vmax.f32 %v813, %v1049
    %v1114 = vmax.f32 %v816, %v1050
    %v1115 = vmax.f32 %v821, %v1051
    %v1116 = vmax.f32 %v824, %v1052
    %v1117 = vmax.f32 %v829, %v1053
    %v1118 = vmax.f32 %v832, %v1054
    %v1119 = vmax.f32 %v837, %v1055
    %v1120 = vmax.f32 %v840, %v1056
    %v1121 = vmax.f32 %v845, %v1057
    %v1122 = vmax.f32 %v848, %v1058
    %v1123 = vmax.f32 %v853, %v1059
    %v1124 = vmax.f32 %v856, %v1060
    %v1125 = vmax.f32 %v861, %v1061
    %v1126 = vmax.f32 %v864, %v1062
    %v1127 = vmax.f32 %v869, %v1063
    %v1128 = vmax.f32 %v872, %v1064
    %v1129 = vmax.f32 %v877, %v1065
    %v1130 = vmax.f32 %v880, %v1066
    %v1131 = vmax.f32 %v885, %v1067
    %v1132 = vmax.f32 %v888, %v1068
    %v1133 = vmax.f32 %v893, %v1069
    %v1134 = vmax.f32 %v896, %v1070
    %v1135 = vmax.f32 %v901, %v1071
    %v1136 = vmax.f32 %v904, %v1072
    %v1137 = vmax.f32 %v909, %v1073
    %v1138 = vmax.f32 %v912, %v1074
    %v1139 = vmax.f32 %v917, %v1075
    %v1140 = vmax.f32 %v920, %v1076
    %v1141 = vmax.f32 %v925, %v1077
    %v1142 = vmax.f32 %v928, %v1078
    %v1143 = vmax.f32 %v933, %v1079
    %v1144 = vmax.f32 %v936, %v1080
    %v1145 = vmax.f32 %v941, %v1081
    %v1146 = vmax.f32 %v944, %v1082
    %v1147 = vmax.f32 %v949, %v1083
    %v1148 = vmax.f32 %v952, %v1084
    %v1149 = vmax.f32 %v957, %v1085
    %v1150 = vmax.f32 %v960, %v1086
    %v1151 = vmax.f32 %v965, %v1087
    %v1152 = vmax.f32 %v968, %v1088
    %v1153 = vmax.f32 %v973, %v1089
    %v1154 = vmax.f32 %v976, %v1090
    %v1155 = vmax.f32 %v981, %v1091
    %v1156 = vmax.f32 %v984, %v1092
    %v1157 = vmax.f32 %v989, %v1093
    %v1158 = vmax.f32 %v992, %v1094
    %v1159 = vmax.f32 %v997, %v1095
    %v1160 = vmax.f32 %v1000, %v1096
    %v1161 = vmax.f32 %v1005, %v1097
    %v1162 = vmax.f32 %v1008, %v1098
    %v1163 = vmax.f32 %v1013, %v1099
    %v1164 = vmax.f32 %v1016, %v1100
    %v1165 = vmax.f32 %v1021, %v1101
    %v1166 = vmax.f32 %v1024, %v1102
    %v1167 = vmax.f32 %v1029, %v1103
    %v1168 = vmax.f32 %v1032, %v1104
    %v1169 = vmax.f32 %v1037, %v1105
    %v1170 = vmax.f32 %v1040, %v1106
    %v1171 = vpack.c.bf16 %v1108, %v1107
    %v1172 = vpack.c.bf16 %v1110, %v1109
    %v1173 = vpack.c.bf16 %v1112, %v1111
    %v1174 = vpack.c.bf16 %v1114, %v1113
    %v1175 = vpack.c.bf16 %v1116, %v1115
    %v1176 = vpack.c.bf16 %v1118, %v1117
    %v1177 = vpack.c.bf16 %v1120, %v1119
    %v1178 = vpack.c.bf16 %v1122, %v1121
    %v1179 = vpack.c.bf16 %v1124, %v1123
    %v1180 = vpack.c.bf16 %v1126, %v1125
    %v1181 = vpack.c.bf16 %v1128, %v1127
    %v1182 = vpack.c.bf16 %v1130, %v1129
    %v1183 = vpack.c.bf16 %v1132, %v1131
    %v1184 = vpack.c.bf16 %v1134, %v1133
    %v1185 = vpack.c.bf16 %v1136, %v1135
    %v1186 = vpack.c.bf16 %v1138, %v1137
    %v1187 = vpack.c.bf16 %v1140, %v1139
    %v1188 = vpack.c.bf16 %v1142, %v1141
    %v1189 = vpack.c.bf16 %v1144, %v1143
    %v1190 = vpack.c.bf16 %v1146, %v1145
    %v1191 = vpack.c.bf16 %v1148, %v1147
    %v1192 = vpack.c.bf16 %v1150, %v1149
    %v1193 = vpack.c.bf16 %v1152, %v1151
    %v1194 = vpack.c.bf16 %v1154, %v1153
    %v1195 = vpack.c.bf16 %v1156, %v1155
    %v1196 = vpack.c.bf16 %v1158, %v1157
    %v1197 = vpack.c.bf16 %v1160, %v1159
    %v1198 = vpack.c.bf16 %v1162, %v1161
    %v1199 = vpack.c.bf16 %v1164, %v1163
    %v1200 = vpack.c.bf16 %v1166, %v1165
    %v1201 = vpack.c.bf16 %v1168, %v1167
    %v1202 = vpack.c.bf16 %v1170, %v1169
    %v1203 = vld [vmem:[%s3] sm:$0xff]
    %v1204 = vld [vmem:[%s3 + $0x8] sm:$0xff]
    %v1205 = vld [vmem:[%s3 + $0x10] sm:$0xff]
    %v1206 = vld [vmem:[%s3 + $0x18] sm:$0xff]
    %v1207 = vld [vmem:[%s3 + $0x20] sm:$0xff]
    %v1208 = vld [vmem:[%s3 + $0x28] sm:$0xff]
    %v1209 = vld [vmem:[%s3 + $0x30] sm:$0xff]
    %v1210 = vld [vmem:[%s3 + $0x38] sm:$0xff]
    %v1211 = vld [vmem:[%s3 + $0x40] sm:$0xff]
    %v1212 = vld [vmem:[%s3 + $0x48] sm:$0xff]
    %v1213 = vld [vmem:[%s3 + $0x50] sm:$0xff]
    %v1214 = vld [vmem:[%s3 + $0x58] sm:$0xff]
    %v1215 = vld [vmem:[%s3 + $0x60] sm:$0xff]
    %v1216 = vld [vmem:[%s3 + $0x68] sm:$0xff]
    %v1217 = vld [vmem:[%s3 + $0x70] sm:$0xff]
    %v1218 = vld [vmem:[%s3 + $0x78] sm:$0xff]
    %v1219 = vld [vmem:[%s3 + $0x80] sm:$0xff]
    %v1220 = vld [vmem:[%s3 + $0x88] sm:$0xff]
    %v1221 = vld [vmem:[%s3 + $0x90] sm:$0xff]
    %v1222 = vld [vmem:[%s3 + $0x98] sm:$0xff]
    %v1223 = vld [vmem:[%s3 + $0xa0] sm:$0xff]
    %v1224 = vld [vmem:[%s3 + $0xa8] sm:$0xff]
    %v1225 = vld [vmem:[%s3 + $0xb0] sm:$0xff]
    %v1226 = vld [vmem:[%s3 + $0xb8] sm:$0xff]
    %v1227 = vld [vmem:[%s3 + $0xc0] sm:$0xff]
    %v1228 = vld [vmem:[%s3 + $0xc8] sm:$0xff]
    %v1229 = vld [vmem:[%s3 + $0xd0] sm:$0xff]
    %v1230 = vld [vmem:[%s3 + $0xd8] sm:$0xff]
    %v1231 = vld [vmem:[%s3 + $0xe0] sm:$0xff]
    %v1232 = vld [vmem:[%s3 + $0xe8] sm:$0xff]
    %v1233 = vld [vmem:[%s3 + $0xf0] sm:$0xff]
    %v1234 = vld [vmem:[%s3 + $0xf8] sm:$0xff]
    %v1235 = vld [vmem:[%s3 + $0x100] sm:$0xff]
    %v1236 = vld [vmem:[%s3 + $0x108] sm:$0xff]
    %v1237 = vld [vmem:[%s3 + $0x110] sm:$0xff]
    %v1238 = vld [vmem:[%s3 + $0x118] sm:$0xff]
    %v1239 = vld [vmem:[%s3 + $0x120] sm:$0xff]
    %v1240 = vld [vmem:[%s3 + $0x128] sm:$0xff]
    %v1241 = vld [vmem:[%s3 + $0x130] sm:$0xff]
    %v1242 = vld [vmem:[%s3 + $0x138] sm:$0xff]
    %v1243 = vld [vmem:[%s3 + $0x140] sm:$0xff]
    %v1244 = vld [vmem:[%s3 + $0x148] sm:$0xff]
    %v1245 = vld [vmem:[%s3 + $0x150] sm:$0xff]
    %v1246 = vld [vmem:[%s3 + $0x158] sm:$0xff]
    %v1247 = vld [vmem:[%s3 + $0x160] sm:$0xff]
    %v1248 = vld [vmem:[%s3 + $0x168] sm:$0xff]
    %v1249 = vld [vmem:[%s3 + $0x170] sm:$0xff]
    %v1250 = vld [vmem:[%s3 + $0x178] sm:$0xff]
    %v1251 = vld [vmem:[%s3 + $0x180] sm:$0xff]
    %v1252 = vld [vmem:[%s3 + $0x188] sm:$0xff]
    %v1253 = vld [vmem:[%s3 + $0x190] sm:$0xff]
    %v1254 = vld [vmem:[%s3 + $0x198] sm:$0xff]
    %v1255 = vld [vmem:[%s3 + $0x1a0] sm:$0xff]
    %v1256 = vld [vmem:[%s3 + $0x1a8] sm:$0xff]
    %v1257 = vld [vmem:[%s3 + $0x1b0] sm:$0xff]
    %v1258 = vld [vmem:[%s3 + $0x1b8] sm:$0xff]
    %v1259 = vld [vmem:[%s3 + $0x1c0] sm:$0xff]
    %v1260 = vld [vmem:[%s3 + $0x1c8] sm:$0xff]
    %v1261 = vld [vmem:[%s3 + $0x1d0] sm:$0xff]
    %v1262 = vld [vmem:[%s3 + $0x1d8] sm:$0xff]
    %v1263 = vld [vmem:[%s3 + $0x1e0] sm:$0xff]
    %v1264 = vld [vmem:[%s3 + $0x1e8] sm:$0xff]
    %v1265 = vld [vmem:[%s3 + $0x1f0] sm:$0xff]
    %v1266 = vld [vmem:[%s3 + $0x1f8] sm:$0xff]
    %v1267 = vld [vmem:[%s4] sm:$0xff]
    %v1268 = vld [vmem:[%s4 + $0x8] sm:$0xff]
    %v1269 = vld [vmem:[%s4 + $0x10] sm:$0xff]
    %v1270 = vld [vmem:[%s4 + $0x18] sm:$0xff]
    %v1271 = vld [vmem:[%s4 + $0x20] sm:$0xff]
    %v1272 = vld [vmem:[%s4 + $0x28] sm:$0xff]
    %v1273 = vld [vmem:[%s4 + $0x30] sm:$0xff]
    %v1274 = vld [vmem:[%s4 + $0x38] sm:$0xff]
    %v1275 = vld [vmem:[%s4 + $0x40] sm:$0xff]
    %v1276 = vld [vmem:[%s4 + $0x48] sm:$0xff]
    %v1277 = vld [vmem:[%s4 + $0x50] sm:$0xff]
    %v1278 = vld [vmem:[%s4 + $0x58] sm:$0xff]
    %v1279 = vld [vmem:[%s4 + $0x60] sm:$0xff]
    %v1280 = vld [vmem:[%s4 + $0x68] sm:$0xff]
    %v1281 = vld [vmem:[%s4 + $0x70] sm:$0xff]
    %v1282 = vld [vmem:[%s4 + $0x78] sm:$0xff]
    %v1283 = vld [vmem:[%s4 + $0x80] sm:$0xff]
    %v1284 = vld [vmem:[%s4 + $0x88] sm:$0xff]
    %v1285 = vld [vmem:[%s4 + $0x90] sm:$0xff]
    %v1286 = vld [vmem:[%s4 + $0x98] sm:$0xff]
    %v1287 = vld [vmem:[%s4 + $0xa0] sm:$0xff]
    %v1288 = vld [vmem:[%s4 + $0xa8] sm:$0xff]
    %v1289 = vld [vmem:[%s4 + $0xb0] sm:$0xff]
    %v1290 = vld [vmem:[%s4 + $0xb8] sm:$0xff]
    %v1291 = vld [vmem:[%s4 + $0xc0] sm:$0xff]
    %v1292 = vld [vmem:[%s4 + $0xc8] sm:$0xff]
    %v1293 = vld [vmem:[%s4 + $0xd0] sm:$0xff]
    %v1294 = vld [vmem:[%s4 + $0xd8] sm:$0xff]
    %v1295 = vld [vmem:[%s4 + $0xe0] sm:$0xff]
    %v1296 = vld [vmem:[%s4 + $0xe8] sm:$0xff]
    %v1297 = vld [vmem:[%s4 + $0xf0] sm:$0xff]
    %v1298 = vld [vmem:[%s4 + $0xf8] sm:$0xff]
    %1300 = vset.pattern.permute.xlu0 0
    %1301 = vperm.xlu0 %1300, %v1267
    %v1302 = vpop.permute.xlu0 %1301
    %1305 = vset.pattern.permute.xlu0 0
    %1306 = vperm.xlu0 %1305, %v1268
    %v1307 = vpop.permute.xlu0 %1306
    %1310 = vset.pattern.permute.xlu0 0
    %1311 = vperm.xlu0 %1310, %v1269
    %v1312 = vpop.permute.xlu0 %1311
    %1315 = vset.pattern.permute.xlu0 0
    %1316 = vperm.xlu0 %1315, %v1270
    %v1317 = vpop.permute.xlu0 %1316
    %1320 = vset.pattern.permute.xlu0 0
    %1321 = vperm.xlu0 %1320, %v1271
    %v1322 = vpop.permute.xlu0 %1321
    %1325 = vset.pattern.permute.xlu0 0
    %1326 = vperm.xlu0 %1325, %v1272
    %v1327 = vpop.permute.xlu0 %1326
    %1330 = vset.pattern.permute.xlu0 0
    %1331 = vperm.xlu0 %1330, %v1273
    %v1332 = vpop.permute.xlu0 %1331
    %1335 = vset.pattern.permute.xlu0 0
    %1336 = vperm.xlu0 %1335, %v1274
    %v1337 = vpop.permute.xlu0 %1336
    %1340 = vset.pattern.permute.xlu0 0
    %1341 = vperm.xlu0 %1340, %v1275
    %v1342 = vpop.permute.xlu0 %1341
    %1345 = vset.pattern.permute.xlu0 0
    %1346 = vperm.xlu0 %1345, %v1276
    %v1347 = vpop.permute.xlu0 %1346
    %1350 = vset.pattern.permute.xlu0 0
    %1351 = vperm.xlu0 %1350, %v1277
    %v1352 = vpop.permute.xlu0 %1351
    %1355 = vset.pattern.permute.xlu0 0
    %1356 = vperm.xlu0 %1355, %v1278
    %v1357 = vpop.permute.xlu0 %1356
    %1360 = vset.pattern.permute.xlu0 0
    %1361 = vperm.xlu0 %1360, %v1279
    %v1362 = vpop.permute.xlu0 %1361
    %1365 = vset.pattern.permute.xlu0 0
    %1366 = vperm.xlu0 %1365, %v1280
    %v1367 = vpop.permute.xlu0 %1366
    %1370 = vset.pattern.permute.xlu0 0
    %1371 = vperm.xlu0 %1370, %v1281
    %v1372 = vpop.permute.xlu0 %1371
    %1375 = vset.pattern.permute.xlu0 0
    %1376 = vperm.xlu0 %1375, %v1282
    %v1377 = vpop.permute.xlu0 %1376
    %1380 = vset.pattern.permute.xlu0 0
    %1381 = vperm.xlu0 %1380, %v1283
    %v1382 = vpop.permute.xlu0 %1381
    %1385 = vset.pattern.permute.xlu0 0
    %1386 = vperm.xlu0 %1385, %v1284
    %v1387 = vpop.permute.xlu0 %1386
    %1390 = vset.pattern.permute.xlu0 0
    %1391 = vperm.xlu0 %1390, %v1285
    %v1392 = vpop.permute.xlu0 %1391
    %1395 = vset.pattern.permute.xlu0 0
    %1396 = vperm.xlu0 %1395, %v1286
    %v1397 = vpop.permute.xlu0 %1396
    %1400 = vset.pattern.permute.xlu0 0
    %1401 = vperm.xlu0 %1400, %v1287
    %v1402 = vpop.permute.xlu0 %1401
    %1405 = vset.pattern.permute.xlu0 0
    %1406 = vperm.xlu0 %1405, %v1288
    %v1407 = vpop.permute.xlu0 %1406
    %1410 = vset.pattern.permute.xlu0 0
    %1411 = vperm.xlu0 %1410, %v1289
    %v1412 = vpop.permute.xlu0 %1411
    %1415 = vset.pattern.permute.xlu0 0
    %1416 = vperm.xlu0 %1415, %v1290
    %v1417 = vpop.permute.xlu0 %1416
    %1420 = vset.pattern.permute.xlu0 0
    %1421 = vperm.xlu0 %1420, %v1291
    %v1422 = vpop.permute.xlu0 %1421
    %1425 = vset.pattern.permute.xlu0 0
    %1426 = vperm.xlu0 %1425, %v1292
    %v1427 = vpop.permute.xlu0 %1426
    %1430 = vset.pattern.permute.xlu0 0
    %1431 = vperm.xlu0 %1430, %v1293
    %v1432 = vpop.permute.xlu0 %1431
    %1435 = vset.pattern.permute.xlu0 0
    %1436 = vperm.xlu0 %1435, %v1294
    %v1437 = vpop.permute.xlu0 %1436
    %1440 = vset.pattern.permute.xlu0 0
    %1441 = vperm.xlu0 %1440, %v1295
    %v1442 = vpop.permute.xlu0 %1441
    %1445 = vset.pattern.permute.xlu0 0
    %1446 = vperm.xlu0 %1445, %v1296
    %v1447 = vpop.permute.xlu0 %1446
    %1450 = vset.pattern.permute.xlu0 0
    %1451 = vperm.xlu0 %1450, %v1297
    %v1452 = vpop.permute.xlu0 %1451
    %1455 = vset.pattern.permute.xlu0 0
    %1456 = vperm.xlu0 %1455, %v1298
    %v1457 = vpop.permute.xlu0 %1456
    %v1523 = vunpack.c.l.b16 %v1203
    %v1524 = vunpack.c.h.b16 %v1203
    %v1525 = vunpack.c.l.b16 %v1204
    %v1526 = vunpack.c.h.b16 %v1204
    %v1527 = vunpack.c.l.b16 %v1205
    %v1528 = vunpack.c.h.b16 %v1205
    %v1529 = vunpack.c.l.b16 %v1206
    %v1530 = vunpack.c.h.b16 %v1206
    %v1531 = vunpack.c.l.b16 %v1207
    %v1532 = vunpack.c.h.b16 %v1207
    %v1533 = vunpack.c.l.b16 %v1208
    %v1534 = vunpack.c.h.b16 %v1208
    %v1535 = vunpack.c.l.b16 %v1209
    %v1536 = vunpack.c.h.b16 %v1209
    %v1537 = vunpack.c.l.b16 %v1210
    %v1538 = vunpack.c.h.b16 %v1210
    %v1539 = vunpack.c.l.b16 %v1211
    %v1540 = vunpack.c.h.b16 %v1211
    %v1541 = vunpack.c.l.b16 %v1212
    %v1542 = vunpack.c.h.b16 %v1212
    %v1543 = vunpack.c.l.b16 %v1213
    %v1544 = vunpack.c.h.b16 %v1213
    %v1545 = vunpack.c.l.b16 %v1214
    %v1546 = vunpack.c.h.b16 %v1214
    %v1547 = vunpack.c.l.b16 %v1215
    %v1548 = vunpack.c.h.b16 %v1215
    %v1549 = vunpack.c.l.b16 %v1216
    %v1550 = vunpack.c.h.b16 %v1216
    %v1551 = vunpack.c.l.b16 %v1217
    %v1552 = vunpack.c.h.b16 %v1217
    %v1553 = vunpack.c.l.b16 %v1218
    %v1554 = vunpack.c.h.b16 %v1218
    %v1555 = vunpack.c.l.b16 %v1219
    %v1556 = vunpack.c.h.b16 %v1219
    %v1557 = vunpack.c.l.b16 %v1220
    %v1558 = vunpack.c.h.b16 %v1220
    %v1559 = vunpack.c.l.b16 %v1221
    %v1560 = vunpack.c.h.b16 %v1221
    %v1561 = vunpack.c.l.b16 %v1222
    %v1562 = vunpack.c.h.b16 %v1222
    %v1563 = vunpack.c.l.b16 %v1223
    %v1564 = vunpack.c.h.b16 %v1223
    %v1565 = vunpack.c.l.b16 %v1224
    %v1566 = vunpack.c.h.b16 %v1224
    %v1567 = vunpack.c.l.b16 %v1225
    %v1568 = vunpack.c.h.b16 %v1225
    %v1569 = vunpack.c.l.b16 %v1226
    %v1570 = vunpack.c.h.b16 %v1226
    %v1571 = vunpack.c.l.b16 %v1227
    %v1572 = vunpack.c.h.b16 %v1227
    %v1573 = vunpack.c.l.b16 %v1228
    %v1574 = vunpack.c.h.b16 %v1228
    %v1575 = vunpack.c.l.b16 %v1229
    %v1576 = vunpack.c.h.b16 %v1229
    %v1577 = vunpack.c.l.b16 %v1230
    %v1578 = vunpack.c.h.b16 %v1230
    %v1579 = vunpack.c.l.b16 %v1231
    %v1580 = vunpack.c.h.b16 %v1231
    %v1581 = vunpack.c.l.b16 %v1232
    %v1582 = vunpack.c.h.b16 %v1232
    %v1583 = vunpack.c.l.b16 %v1233
    %v1584 = vunpack.c.h.b16 %v1233
    %v1585 = vunpack.c.l.b16 %v1234
    %v1586 = vunpack.c.h.b16 %v1234
    %v1587 = vunpack.c.l.b16 %v1235
    %v1588 = vunpack.c.h.b16 %v1235
    %v1589 = vunpack.c.l.b16 %v1236
    %v1590 = vunpack.c.h.b16 %v1236
    %v1591 = vunpack.c.l.b16 %v1237
    %v1592 = vunpack.c.h.b16 %v1237
    %v1593 = vunpack.c.l.b16 %v1238
    %v1594 = vunpack.c.h.b16 %v1238
    %v1595 = vunpack.c.l.b16 %v1239
    %v1596 = vunpack.c.h.b16 %v1239
    %v1597 = vunpack.c.l.b16 %v1240
    %v1598 = vunpack.c.h.b16 %v1240
    %v1599 = vunpack.c.l.b16 %v1241
    %v1600 = vunpack.c.h.b16 %v1241
    %v1601 = vunpack.c.l.b16 %v1242
    %v1602 = vunpack.c.h.b16 %v1242
    %v1603 = vunpack.c.l.b16 %v1243
    %v1604 = vunpack.c.h.b16 %v1243
    %v1605 = vunpack.c.l.b16 %v1244
    %v1606 = vunpack.c.h.b16 %v1244
    %v1607 = vunpack.c.l.b16 %v1245
    %v1608 = vunpack.c.h.b16 %v1245
    %v1609 = vunpack.c.l.b16 %v1246
    %v1610 = vunpack.c.h.b16 %v1246
    %v1611 = vunpack.c.l.b16 %v1247
    %v1612 = vunpack.c.h.b16 %v1247
    %v1613 = vunpack.c.l.b16 %v1248
    %v1614 = vunpack.c.h.b16 %v1248
    %v1615 = vunpack.c.l.b16 %v1249
    %v1616 = vunpack.c.h.b16 %v1249
    %v1617 = vunpack.c.l.b16 %v1250
    %v1618 = vunpack.c.h.b16 %v1250
    %v1619 = vunpack.c.l.b16 %v1251
    %v1620 = vunpack.c.h.b16 %v1251
    %v1621 = vunpack.c.l.b16 %v1252
    %v1622 = vunpack.c.h.b16 %v1252
    %v1623 = vunpack.c.l.b16 %v1253
    %v1624 = vunpack.c.h.b16 %v1253
    %v1625 = vunpack.c.l.b16 %v1254
    %v1626 = vunpack.c.h.b16 %v1254
    %v1627 = vunpack.c.l.b16 %v1255
    %v1628 = vunpack.c.h.b16 %v1255
    %v1629 = vunpack.c.l.b16 %v1256
    %v1630 = vunpack.c.h.b16 %v1256
    %v1631 = vunpack.c.l.b16 %v1257
    %v1632 = vunpack.c.h.b16 %v1257
    %v1633 = vunpack.c.l.b16 %v1258
    %v1634 = vunpack.c.h.b16 %v1258
    %v1635 = vunpack.c.l.b16 %v1259
    %v1636 = vunpack.c.h.b16 %v1259
    %v1637 = vunpack.c.l.b16 %v1260
    %v1638 = vunpack.c.h.b16 %v1260
    %v1639 = vunpack.c.l.b16 %v1261
    %v1640 = vunpack.c.h.b16 %v1261
    %v1641 = vunpack.c.l.b16 %v1262
    %v1642 = vunpack.c.h.b16 %v1262
    %v1643 = vunpack.c.l.b16 %v1263
    %v1644 = vunpack.c.h.b16 %v1263
    %v1645 = vunpack.c.l.b16 %v1264
    %v1646 = vunpack.c.h.b16 %v1264
    %v1647 = vunpack.c.l.b16 %v1265
    %v1648 = vunpack.c.h.b16 %v1265
    %v1649 = vunpack.c.l.b16 %v1266
    %v1650 = vunpack.c.h.b16 %v1266
    %v1651 = vpack.c.b16 %v1527, %v1523
    %v1652 = vpack.c.b16 %v1528, %v1524
    %v1653 = vpack.c.b16 %v1529, %v1525
    %v1654 = vpack.c.b16 %v1530, %v1526
    %v1655 = vpack.c.b16 %v1535, %v1531
    %v1656 = vpack.c.b16 %v1536, %v1532
    %v1657 = vpack.c.b16 %v1537, %v1533
    %v1658 = vpack.c.b16 %v1538, %v1534
    %v1659 = vpack.c.b16 %v1543, %v1539
    %v1660 = vpack.c.b16 %v1544, %v1540
    %v1661 = vpack.c.b16 %v1545, %v1541
    %v1662 = vpack.c.b16 %v1546, %v1542
    %v1663 = vpack.c.b16 %v1551, %v1547
    %v1664 = vpack.c.b16 %v1552, %v1548
    %v1665 = vpack.c.b16 %v1553, %v1549
    %v1666 = vpack.c.b16 %v1554, %v1550
    %v1667 = vpack.c.b16 %v1559, %v1555
    %v1668 = vpack.c.b16 %v1560, %v1556
    %v1669 = vpack.c.b16 %v1561, %v1557
    %v1670 = vpack.c.b16 %v1562, %v1558
    %v1671 = vpack.c.b16 %v1567, %v1563
    %v1672 = vpack.c.b16 %v1568, %v1564
    %v1673 = vpack.c.b16 %v1569, %v1565
    %v1674 = vpack.c.b16 %v1570, %v1566
    %v1675 = vpack.c.b16 %v1575, %v1571
    %v1676 = vpack.c.b16 %v1576, %v1572
    %v1677 = vpack.c.b16 %v1577, %v1573
    %v1678 = vpack.c.b16 %v1578, %v1574
    %v1679 = vpack.c.b16 %v1583, %v1579
    %v1680 = vpack.c.b16 %v1584, %v1580
    %v1681 = vpack.c.b16 %v1585, %v1581
    %v1682 = vpack.c.b16 %v1586, %v1582
    %v1683 = vpack.c.b16 %v1591, %v1587
    %v1684 = vpack.c.b16 %v1592, %v1588
    %v1685 = vpack.c.b16 %v1593, %v1589
    %v1686 = vpack.c.b16 %v1594, %v1590
    %v1687 = vpack.c.b16 %v1599, %v1595
    %v1688 = vpack.c.b16 %v1600, %v1596
    %v1689 = vpack.c.b16 %v1601, %v1597
    %v1690 = vpack.c.b16 %v1602, %v1598
    %v1691 = vpack.c.b16 %v1607, %v1603
    %v1692 = vpack.c.b16 %v1608, %v1604
    %v1693 = vpack.c.b16 %v1609, %v1605
    %v1694 = vpack.c.b16 %v1610, %v1606
    %v1695 = vpack.c.b16 %v1615, %v1611
    %v1696 = vpack.c.b16 %v1616, %v1612
    %v1697 = vpack.c.b16 %v1617, %v1613
    %v1698 = vpack.c.b16 %v1618, %v1614
    %v1699 = vpack.c.b16 %v1623, %v1619
    %v1700 = vpack.c.b16 %v1624, %v1620
    %v1701 = vpack.c.b16 %v1625, %v1621
    %v1702 = vpack.c.b16 %v1626, %v1622
    %v1703 = vpack.c.b16 %v1631, %v1627
    %v1704 = vpack.c.b16 %v1632, %v1628
    %v1705 = vpack.c.b16 %v1633, %v1629
    %v1706 = vpack.c.b16 %v1634, %v1630
    %v1707 = vpack.c.b16 %v1639, %v1635
    %v1708 = vpack.c.b16 %v1640, %v1636
    %v1709 = vpack.c.b16 %v1641, %v1637
    %v1710 = vpack.c.b16 %v1642, %v1638
    %v1711 = vpack.c.b16 %v1647, %v1643
    %v1712 = vpack.c.b16 %v1648, %v1644
    %v1713 = vpack.c.b16 %v1649, %v1645
    %v1714 = vpack.c.b16 %v1650, %v1646
    %1779 = vmatprep.subr.bf16.mxu0 0
    %1780 = vmatpush1.bf16.msra.mxu0 %v1178
    %1781 = vmatprep.subr.bf16.mxu0 0
    %1782 = vmatpush1.bf16.msra.mxu0 %v1177
    %1783 = vmatprep.subr.bf16.mxu0 0
    %1784 = vmatpush1.bf16.msra.mxu0 %v1176
    %1785 = vmatprep.subr.bf16.mxu0 0
    %1786 = vmatpush1.bf16.msra.mxu0 %v1175
    %1787 = vmatprep.subr.bf16.mxu0 0
    %1788 = vmatpush1.bf16.msra.mxu0 %v1174
    %1789 = vmatprep.subr.bf16.mxu0 0
    %1790 = vmatpush1.bf16.msra.mxu0 %v1173
    %1791 = vmatprep.subr.bf16.mxu0 0
    %1792 = vmatpush1.bf16.msra.mxu0 %v1172
    %1793 = vmatprep.subr.bf16.mxu0 0
    %1794 = vmatpush1.bf16.msra.mxu0 %v1171
    %1795 = vmatprep.subr.bf16.mxu0 0
    %1796 = vmatpush2.bf16.msra.mxu0 %v1186
    %1797 = vmatprep.subr.bf16.mxu0 0
    %1798 = vmatpush2.bf16.msra.mxu0 %v1185
    %1799 = vmatprep.subr.bf16.mxu0 0
    %1800 = vmatpush2.bf16.msra.mxu0 %v1184
    %1801 = vmatprep.subr.bf16.mxu0 0
    %1802 = vmatpush2.bf16.msra.mxu0 %v1183
    %1803 = vmatprep.subr.bf16.mxu0 0
    %1804 = vmatpush2.bf16.msra.mxu0 %v1182
    %1805 = vmatprep.subr.bf16.mxu0 0
    %1806 = vmatpush2.bf16.msra.mxu0 %v1181
    %1807 = vmatprep.subr.bf16.mxu0 0
    %1808 = vmatpush2.bf16.msra.mxu0 %v1180
    %1809 = vmatprep.subr.bf16.mxu0 0
    %1810 = vmatpush2.bf16.msra.mxu0 %v1179
    %1811 = vmatprep.mubr.bf16.mxu0 %v1652
    %1812 = vmatmul.mubr.bf16.gmra.mxu0 %v1651
    %v1813 = vpop.f32.mrf.mxu0
    %v1814 = vadd.f32 %v1302, %v1813
    %v1815 = vpop.f32.mrf.mxu0
    %v1816 = vpop.f32.mrf.mxu0
    %v1817 = vadd.f32 %v1307, %v1816
    %v1818 = vpop.f32.mrf.mxu0
    %1819 = vmatprep.mubr.bf16.mxu0 %v1656
    %1820 = vmatmul.mubr.bf16.gmra.mxu0 %v1655
    %v1821 = vpop.f32.mrf.mxu0
    %v1822 = vadd.f32 %v1312, %v1821
    %v1823 = vpop.f32.mrf.mxu0
    %v1824 = vpop.f32.mrf.mxu0
    %v1825 = vadd.f32 %v1317, %v1824
    %v1826 = vpop.f32.mrf.mxu0
    %1827 = vmatprep.mubr.bf16.mxu0 %v1660
    %1828 = vmatmul.mubr.bf16.gmra.mxu0 %v1659
    %v1829 = vpop.f32.mrf.mxu0
    %v1830 = vadd.f32 %v1322, %v1829
    %v1831 = vpop.f32.mrf.mxu0
    %v1832 = vpop.f32.mrf.mxu0
    %v1833 = vadd.f32 %v1327, %v1832
    %v1834 = vpop.f32.mrf.mxu0
    %1835 = vmatprep.mubr.bf16.mxu0 %v1664
    %1836 = vmatmul.mubr.bf16.gmra.mxu0 %v1663
    %v1837 = vpop.f32.mrf.mxu0
    %v1838 = vadd.f32 %v1332, %v1837
    %v1839 = vpop.f32.mrf.mxu0
    %v1840 = vpop.f32.mrf.mxu0
    %v1841 = vadd.f32 %v1337, %v1840
    %v1842 = vpop.f32.mrf.mxu0
    %1843 = vmatprep.mubr.bf16.mxu0 %v1668
    %1844 = vmatmul.mubr.bf16.gmra.mxu0 %v1667
    %v1845 = vpop.f32.mrf.mxu0
    %v1846 = vadd.f32 %v1342, %v1845
    %v1847 = vpop.f32.mrf.mxu0
    %v1848 = vpop.f32.mrf.mxu0
    %v1849 = vadd.f32 %v1347, %v1848
    %v1850 = vpop.f32.mrf.mxu0
    %1851 = vmatprep.mubr.bf16.mxu0 %v1672
    %1852 = vmatmul.mubr.bf16.gmra.mxu0 %v1671
    %v1853 = vpop.f32.mrf.mxu0
    %v1854 = vadd.f32 %v1352, %v1853
    %v1855 = vpop.f32.mrf.mxu0
    %v1856 = vpop.f32.mrf.mxu0
    %v1857 = vadd.f32 %v1357, %v1856
    %v1858 = vpop.f32.mrf.mxu0
    %1859 = vmatprep.mubr.bf16.mxu0 %v1676
    %1860 = vmatmul.mubr.bf16.gmra.mxu0 %v1675
    %v1861 = vpop.f32.mrf.mxu0
    %v1862 = vadd.f32 %v1362, %v1861
    %v1863 = vpop.f32.mrf.mxu0
    %v1864 = vpop.f32.mrf.mxu0
    %v1865 = vadd.f32 %v1367, %v1864
    %v1866 = vpop.f32.mrf.mxu0
    %1867 = vmatprep.mubr.bf16.mxu0 %v1680
    %1868 = vmatmul.mubr.bf16.gmra.mxu0 %v1679
    %v1869 = vpop.f32.mrf.mxu0
    %v1870 = vadd.f32 %v1372, %v1869
    %v1871 = vpop.f32.mrf.mxu0
    %v1872 = vpop.f32.mrf.mxu0
    %v1873 = vadd.f32 %v1377, %v1872
    %v1874 = vpop.f32.mrf.mxu0
    %1875 = vmatprep.mubr.bf16.mxu0 %v1684
    %1876 = vmatmul.mubr.bf16.gmra.mxu0 %v1683
    %v1877 = vpop.f32.mrf.mxu0
    %v1878 = vadd.f32 %v1382, %v1877
    %v1879 = vpop.f32.mrf.mxu0
    %v1880 = vpop.f32.mrf.mxu0
    %v1881 = vadd.f32 %v1387, %v1880
    %v1882 = vpop.f32.mrf.mxu0
    %1883 = vmatprep.mubr.bf16.mxu0 %v1688
    %1884 = vmatmul.mubr.bf16.gmra.mxu0 %v1687
    %v1885 = vpop.f32.mrf.mxu0
    %v1886 = vadd.f32 %v1392, %v1885
    %v1887 = vpop.f32.mrf.mxu0
    %v1888 = vpop.f32.mrf.mxu0
    %v1889 = vadd.f32 %v1397, %v1888
    %v1890 = vpop.f32.mrf.mxu0
    %1891 = vmatprep.mubr.bf16.mxu0 %v1692
    %1892 = vmatmul.mubr.bf16.gmra.mxu0 %v1691
    %v1893 = vpop.f32.mrf.mxu0
    %v1894 = vadd.f32 %v1402, %v1893
    %v1895 = vpop.f32.mrf.mxu0
    %v1896 = vpop.f32.mrf.mxu0
    %v1897 = vadd.f32 %v1407, %v1896
    %v1898 = vpop.f32.mrf.mxu0
    %1899 = vmatprep.mubr.bf16.mxu0 %v1696
    %1900 = vmatmul.mubr.bf16.gmra.mxu0 %v1695
    %v1901 = vpop.f32.mrf.mxu0
    %v1902 = vadd.f32 %v1412, %v1901
    %v1903 = vpop.f32.mrf.mxu0
    %v1904 = vpop.f32.mrf.mxu0
    %v1905 = vadd.f32 %v1417, %v1904
    %v1906 = vpop.f32.mrf.mxu0
    %1907 = vmatprep.mubr.bf16.mxu0 %v1700
    %1908 = vmatmul.mubr.bf16.gmra.mxu0 %v1699
    %v1909 = vpop.f32.mrf.mxu0
    %v1910 = vadd.f32 %v1422, %v1909
    %v1911 = vpop.f32.mrf.mxu0
    %v1912 = vpop.f32.mrf.mxu0
    %v1913 = vadd.f32 %v1427, %v1912
    %v1914 = vpop.f32.mrf.mxu0
    %1915 = vmatprep.mubr.bf16.mxu0 %v1704
    %1916 = vmatmul.mubr.bf16.gmra.mxu0 %v1703
    %v1917 = vpop.f32.mrf.mxu0
    %v1918 = vadd.f32 %v1432, %v1917
    %v1919 = vpop.f32.mrf.mxu0
    %v1920 = vpop.f32.mrf.mxu0
    %v1921 = vadd.f32 %v1437, %v1920
    %v1922 = vpop.f32.mrf.mxu0
    %1923 = vmatprep.mubr.bf16.mxu0 %v1708
    %1924 = vmatmul.mubr.bf16.gmra.mxu0 %v1707
    %v1925 = vpop.f32.mrf.mxu0
    %v1926 = vadd.f32 %v1442, %v1925
    %v1927 = vpop.f32.mrf.mxu0
    %v1928 = vpop.f32.mrf.mxu0
    %v1929 = vadd.f32 %v1447, %v1928
    %v1930 = vpop.f32.mrf.mxu0
    %1931 = vmatprep.mubr.bf16.mxu0 %v1712
    %1932 = vmatmul.mubr.bf16.gmra.mxu0 %v1711
    %v1933 = vpop.f32.mrf.mxu0
    %v1934 = vadd.f32 %v1452, %v1933
    %v1935 = vpop.f32.mrf.mxu0
    %v1936 = vpop.f32.mrf.mxu0
    %v1937 = vadd.f32 %v1457, %v1936
    %v1938 = vpop.f32.mrf.mxu0
    %1939 = vdwg.mxu0
    %1940 = vmatprep.subr.bf16.mxu0 0
    %1941 = vmatpush1.bf16.msra.mxu0 %v1194
    %1942 = vmatprep.subr.bf16.mxu0 0
    %1943 = vmatpush1.bf16.msra.mxu0 %v1193
    %1944 = vmatprep.subr.bf16.mxu0 0
    %1945 = vmatpush1.bf16.msra.mxu0 %v1192
    %1946 = vmatprep.subr.bf16.mxu0 0
    %1947 = vmatpush1.bf16.msra.mxu0 %v1191
    %1948 = vmatprep.subr.bf16.mxu0 0
    %1949 = vmatpush1.bf16.msra.mxu0 %v1190
    %1950 = vmatprep.subr.bf16.mxu0 0
    %1951 = vmatpush1.bf16.msra.mxu0 %v1189
    %1952 = vmatprep.subr.bf16.mxu0 0
    %1953 = vmatpush1.bf16.msra.mxu0 %v1188
    %1954 = vmatprep.subr.bf16.mxu0 0
    %1955 = vmatpush1.bf16.msra.mxu0 %v1187
    %1956 = vmatprep.subr.bf16.mxu0 0
    %1957 = vmatpush2.bf16.msra.mxu0 %v1202
    %1958 = vmatprep.subr.bf16.mxu0 0
    %1959 = vmatpush2.bf16.msra.mxu0 %v1201
    %1960 = vmatprep.subr.bf16.mxu0 0
    %1961 = vmatpush2.bf16.msra.mxu0 %v1200
    %1962 = vmatprep.subr.bf16.mxu0 0
    %1963 = vmatpush2.bf16.msra.mxu0 %v1199
    %1964 = vmatprep.subr.bf16.mxu0 0
    %1965 = vmatpush2.bf16.msra.mxu0 %v1198
    %1966 = vmatprep.subr.bf16.mxu0 0
    %1967 = vmatpush2.bf16.msra.mxu0 %v1197
    %1968 = vmatprep.subr.bf16.mxu0 0
    %1969 = vmatpush2.bf16.msra.mxu0 %v1196
    %1970 = vmatprep.subr.bf16.mxu0 0
    %1971 = vmatpush2.bf16.msra.mxu0 %v1195
    %1972 = vmatprep.mubr.bf16.mxu0 %v1654
    %1973 = vmatmul.mubr.bf16.gmra.mxu0 %v1653
    %v1974 = vpop.f32.mrf.mxu0
    %v1975 = vadd.f32 %v1814, %v1974
    %v1976 = vpop.f32.mrf.mxu0
    %v1977 = vpop.f32.mrf.mxu0
    %v1978 = vadd.f32 %v1817, %v1977
    %v1979 = vpop.f32.mrf.mxu0
    %1980 = vmatprep.mubr.bf16.mxu0 %v1658
    %1981 = vmatmul.mubr.bf16.gmra.mxu0 %v1657
    %v1982 = vpop.f32.mrf.mxu0
    %v1983 = vadd.f32 %v1822, %v1982
    %v1984 = vpop.f32.mrf.mxu0
    %v1985 = vpop.f32.mrf.mxu0
    %v1986 = vadd.f32 %v1825, %v1985
    %v1987 = vpop.f32.mrf.mxu0
    %1988 = vmatprep.mubr.bf16.mxu0 %v1662
    %1989 = vmatmul.mubr.bf16.gmra.mxu0 %v1661
    %v1990 = vpop.f32.mrf.mxu0
    %v1991 = vadd.f32 %v1830, %v1990
    %v1992 = vpop.f32.mrf.mxu0
    %v1993 = vpop.f32.mrf.mxu0
    %v1994 = vadd.f32 %v1833, %v1993
    %v1995 = vpop.f32.mrf.mxu0
    %1996 = vmatprep.mubr.bf16.mxu0 %v1666
    %1997 = vmatmul.mubr.bf16.gmra.mxu0 %v1665
    %v1998 = vpop.f32.mrf.mxu0
    %v1999 = vadd.f32 %v1838, %v1998
    %v2000 = vpop.f32.mrf.mxu0
    %v2001 = vpop.f32.mrf.mxu0
    %v2002 = vadd.f32 %v1841, %v2001
    %v2003 = vpop.f32.mrf.mxu0
    %2004 = vmatprep.mubr.bf16.mxu0 %v1670
    %2005 = vmatmul.mubr.bf16.gmra.mxu0 %v1669
    %v2006 = vpop.f32.mrf.mxu0
    %v2007 = vadd.f32 %v1846, %v2006
    %v2008 = vpop.f32.mrf.mxu0
    %v2009 = vpop.f32.mrf.mxu0
    %v2010 = vadd.f32 %v1849, %v2009
    %v2011 = vpop.f32.mrf.mxu0
    %2012 = vmatprep.mubr.bf16.mxu0 %v1674
    %2013 = vmatmul.mubr.bf16.gmra.mxu0 %v1673
    %v2014 = vpop.f32.mrf.mxu0
    %v2015 = vadd.f32 %v1854, %v2014
    %v2016 = vpop.f32.mrf.mxu0
    %v2017 = vpop.f32.mrf.mxu0
    %v2018 = vadd.f32 %v1857, %v2017
    %v2019 = vpop.f32.mrf.mxu0
    %2020 = vmatprep.mubr.bf16.mxu0 %v1678
    %2021 = vmatmul.mubr.bf16.gmra.mxu0 %v1677
    %v2022 = vpop.f32.mrf.mxu0
    %v2023 = vadd.f32 %v1862, %v2022
    %v2024 = vpop.f32.mrf.mxu0
    %v2025 = vpop.f32.mrf.mxu0
    %v2026 = vadd.f32 %v1865, %v2025
    %v2027 = vpop.f32.mrf.mxu0
    %2028 = vmatprep.mubr.bf16.mxu0 %v1682
    %2029 = vmatmul.mubr.bf16.gmra.mxu0 %v1681
    %v2030 = vpop.f32.mrf.mxu0
    %v2031 = vadd.f32 %v1870, %v2030
    %v2032 = vpop.f32.mrf.mxu0
    %v2033 = vpop.f32.mrf.mxu0
    %v2034 = vadd.f32 %v1873, %v2033
    %v2035 = vpop.f32.mrf.mxu0
    %2036 = vmatprep.mubr.bf16.mxu0 %v1686
    %2037 = vmatmul.mubr.bf16.gmra.mxu0 %v1685
    %v2038 = vpop.f32.mrf.mxu0
    %v2039 = vadd.f32 %v1878, %v2038
    %v2040 = vpop.f32.mrf.mxu0
    %v2041 = vpop.f32.mrf.mxu0
    %v2042 = vadd.f32 %v1881, %v2041
    %v2043 = vpop.f32.mrf.mxu0
    %2044 = vmatprep.mubr.bf16.mxu0 %v1690
    %2045 = vmatmul.mubr.bf16.gmra.mxu0 %v1689
    %v2046 = vpop.f32.mrf.mxu0
    %v2047 = vadd.f32 %v1886, %v2046
    %v2048 = vpop.f32.mrf.mxu0
    %v2049 = vpop.f32.mrf.mxu0
    %v2050 = vadd.f32 %v1889, %v2049
    %v2051 = vpop.f32.mrf.mxu0
    %2052 = vmatprep.mubr.bf16.mxu0 %v1694
    %2053 = vmatmul.mubr.bf16.gmra.mxu0 %v1693
    %v2054 = vpop.f32.mrf.mxu0
    %v2055 = vadd.f32 %v1894, %v2054
    %v2056 = vpop.f32.mrf.mxu0
    %v2057 = vpop.f32.mrf.mxu0
    %v2058 = vadd.f32 %v1897, %v2057
    %v2059 = vpop.f32.mrf.mxu0
    %2060 = vmatprep.mubr.bf16.mxu0 %v1698
    %2061 = vmatmul.mubr.bf16.gmra.mxu0 %v1697
    %v2062 = vpop.f32.mrf.mxu0
    %v2063 = vadd.f32 %v1902, %v2062
    %v2064 = vpop.f32.mrf.mxu0
    %v2065 = vpop.f32.mrf.mxu0
    %v2066 = vadd.f32 %v1905, %v2065
    %v2067 = vpop.f32.mrf.mxu0
    %2068 = vmatprep.mubr.bf16.mxu0 %v1702
    %2069 = vmatmul.mubr.bf16.gmra.mxu0 %v1701
    %v2070 = vpop.f32.mrf.mxu0
    %v2071 = vadd.f32 %v1910, %v2070
    %v2072 = vpop.f32.mrf.mxu0
    %v2073 = vpop.f32.mrf.mxu0
    %v2074 = vadd.f32 %v1913, %v2073
    %v2075 = vpop.f32.mrf.mxu0
    %2076 = vmatprep.mubr.bf16.mxu0 %v1706
    %2077 = vmatmul.mubr.bf16.gmra.mxu0 %v1705
    %v2078 = vpop.f32.mrf.mxu0
    %v2079 = vadd.f32 %v1918, %v2078
    %v2080 = vpop.f32.mrf.mxu0
    %v2081 = vpop.f32.mrf.mxu0
    %v2082 = vadd.f32 %v1921, %v2081
    %v2083 = vpop.f32.mrf.mxu0
    %2084 = vmatprep.mubr.bf16.mxu0 %v1710
    %2085 = vmatmul.mubr.bf16.gmra.mxu0 %v1709
    %v2086 = vpop.f32.mrf.mxu0
    %v2087 = vadd.f32 %v1926, %v2086
    %v2088 = vpop.f32.mrf.mxu0
    %v2089 = vpop.f32.mrf.mxu0
    %v2090 = vadd.f32 %v1929, %v2089
    %v2091 = vpop.f32.mrf.mxu0
    %2092 = vmatprep.mubr.bf16.mxu0 %v1714
    %2093 = vmatmul.mubr.bf16.gmra.mxu0 %v1713
    %v2094 = vpop.f32.mrf.mxu0
    %v2095 = vadd.f32 %v1934, %v2094
    %v2096 = vpop.f32.mrf.mxu0
    %v2097 = vpop.f32.mrf.mxu0
    %v2098 = vadd.f32 %v1937, %v2097
    %v2099 = vpop.f32.mrf.mxu0
    %2100 = vdwg.mxu0
    %v2101 = vmul.f32 %v1975, 0.01
    %v2102 = vmul.f32 %v1978, 0.01
    %v2103 = vmul.f32 %v1983, 0.01
    %v2104 = vmul.f32 %v1986, 0.01
    %v2105 = vmul.f32 %v1991, 0.01
    %v2106 = vmul.f32 %v1994, 0.01
    %v2107 = vmul.f32 %v1999, 0.01
    %v2108 = vmul.f32 %v2002, 0.01
    %v2109 = vmul.f32 %v2007, 0.01
    %v2110 = vmul.f32 %v2010, 0.01
    %v2111 = vmul.f32 %v2015, 0.01
    %v2112 = vmul.f32 %v2018, 0.01
    %v2113 = vmul.f32 %v2023, 0.01
    %v2114 = vmul.f32 %v2026, 0.01
    %v2115 = vmul.f32 %v2031, 0.01
    %v2116 = vmul.f32 %v2034, 0.01
    %v2117 = vmul.f32 %v2039, 0.01
    %v2118 = vmul.f32 %v2042, 0.01
    %v2119 = vmul.f32 %v2047, 0.01
    %v2120 = vmul.f32 %v2050, 0.01
    %v2121 = vmul.f32 %v2055, 0.01
    %v2122 = vmul.f32 %v2058, 0.01
    %v2123 = vmul.f32 %v2063, 0.01
    %v2124 = vmul.f32 %v2066, 0.01
    %v2125 = vmul.f32 %v2071, 0.01
    %v2126 = vmul.f32 %v2074, 0.01
    %v2127 = vmul.f32 %v2079, 0.01
    %v2128 = vmul.f32 %v2082, 0.01
    %v2129 = vmul.f32 %v2087, 0.01
    %v2130 = vmul.f32 %v2090, 0.01
    %v2131 = vmul.f32 %v2095, 0.01
    %v2132 = vmul.f32 %v2098, 0.01
    %v2133 = vmax.f32 %v1975, %v2101
    %v2134 = vmax.f32 %v1978, %v2102
    %v2135 = vmax.f32 %v1983, %v2103
    %v2136 = vmax.f32 %v1986, %v2104
    %v2137 = vmax.f32 %v1991, %v2105
    %v2138 = vmax.f32 %v1994, %v2106
    %v2139 = vmax.f32 %v1999, %v2107
    %v2140 = vmax.f32 %v2002, %v2108
    %v2141 = vmax.f32 %v2007, %v2109
    %v2142 = vmax.f32 %v2010, %v2110
    %v2143 = vmax.f32 %v2015, %v2111
    %v2144 = vmax.f32 %v2018, %v2112
    %v2145 = vmax.f32 %v2023, %v2113
    %v2146 = vmax.f32 %v2026, %v2114
    %v2147 = vmax.f32 %v2031, %v2115
    %v2148 = vmax.f32 %v2034, %v2116
    %v2149 = vmax.f32 %v2039, %v2117
    %v2150 = vmax.f32 %v2042, %v2118
    %v2151 = vmax.f32 %v2047, %v2119
    %v2152 = vmax.f32 %v2050, %v2120
    %v2153 = vmax.f32 %v2055, %v2121
    %v2154 = vmax.f32 %v2058, %v2122
    %v2155 = vmax.f32 %v2063, %v2123
    %v2156 = vmax.f32 %v2066, %v2124
    %v2157 = vmax.f32 %v2071, %v2125
    %v2158 = vmax.f32 %v2074, %v2126
    %v2159 = vmax.f32 %v2079, %v2127
    %v2160 = vmax.f32 %v2082, %v2128
    %v2161 = vmax.f32 %v2087, %v2129
    %v2162 = vmax.f32 %v2090, %v2130
    %v2163 = vmax.f32 %v2095, %v2131
    %v2164 = vmax.f32 %v2098, %v2132
    %v2165 = vpack.c.bf16 %v2134, %v2133
    %v2166 = vpack.c.bf16 %v2136, %v2135
    %v2167 = vpack.c.bf16 %v2138, %v2137
    %v2168 = vpack.c.bf16 %v2140, %v2139
    %v2169 = vpack.c.bf16 %v2142, %v2141
    %v2170 = vpack.c.bf16 %v2144, %v2143
    %v2171 = vpack.c.bf16 %v2146, %v2145
    %v2172 = vpack.c.bf16 %v2148, %v2147
    %v2173 = vpack.c.bf16 %v2150, %v2149
    %v2174 = vpack.c.bf16 %v2152, %v2151
    %v2175 = vpack.c.bf16 %v2154, %v2153
    %v2176 = vpack.c.bf16 %v2156, %v2155
    %v2177 = vpack.c.bf16 %v2158, %v2157
    %v2178 = vpack.c.bf16 %v2160, %v2159
    %v2179 = vpack.c.bf16 %v2162, %v2161
    %v2180 = vpack.c.bf16 %v2164, %v2163
    %v2181 = vld [vmem:[%s5] sm:$0xff]
    %v2182 = vld [vmem:[%s5 + $0x8] sm:$0xff]
    %v2183 = vld [vmem:[%s5 + $0x10] sm:$0xff]
    %v2184 = vld [vmem:[%s5 + $0x18] sm:$0xff]
    %v2185 = vld [vmem:[%s5 + $0x20] sm:$0xff]
    %v2186 = vld [vmem:[%s5 + $0x28] sm:$0xff]
    %v2187 = vld [vmem:[%s5 + $0x30] sm:$0xff]
    %v2188 = vld [vmem:[%s5 + $0x38] sm:$0xff]
    %v2189 = vld [vmem:[%s5 + $0x40] sm:$0xff]
    %v2190 = vld [vmem:[%s5 + $0x48] sm:$0xff]
    %v2191 = vld [vmem:[%s5 + $0x50] sm:$0xff]
    %v2192 = vld [vmem:[%s5 + $0x58] sm:$0xff]
    %v2193 = vld [vmem:[%s5 + $0x60] sm:$0xff]
    %v2194 = vld [vmem:[%s5 + $0x68] sm:$0xff]
    %v2195 = vld [vmem:[%s5 + $0x70] sm:$0xff]
    %v2196 = vld [vmem:[%s5 + $0x78] sm:$0xff]
    %v2197 = vld [vmem:[%s6] sm:$0xff]
    %v2198 = vld [vmem:[%s6 + $0x8] sm:$0xff]
    %v2199 = vld [vmem:[%s6 + $0x10] sm:$0xff]
    %v2200 = vld [vmem:[%s6 + $0x18] sm:$0xff]
    %v2201 = vld [vmem:[%s6 + $0x20] sm:$0xff]
    %v2202 = vld [vmem:[%s6 + $0x28] sm:$0xff]
    %v2203 = vld [vmem:[%s6 + $0x30] sm:$0xff]
    %v2204 = vld [vmem:[%s6 + $0x38] sm:$0xff]
    %v2205 = vld [vmem:[%s6 + $0x40] sm:$0xff]
    %v2206 = vld [vmem:[%s6 + $0x48] sm:$0xff]
    %v2207 = vld [vmem:[%s6 + $0x50] sm:$0xff]
    %v2208 = vld [vmem:[%s6 + $0x58] sm:$0xff]
    %v2209 = vld [vmem:[%s6 + $0x60] sm:$0xff]
    %v2210 = vld [vmem:[%s6 + $0x68] sm:$0xff]
    %v2211 = vld [vmem:[%s6 + $0x70] sm:$0xff]
    %v2212 = vld [vmem:[%s6 + $0x78] sm:$0xff]
    %2214 = vset.pattern.permute.xlu0 0
    %2215 = vperm.xlu0 %2214, %v2197
    %v2216 = vpop.permute.xlu0 %2215
    %2219 = vset.pattern.permute.xlu0 0
    %2220 = vperm.xlu0 %2219, %v2198
    %v2221 = vpop.permute.xlu0 %2220
    %2224 = vset.pattern.permute.xlu0 0
    %2225 = vperm.xlu0 %2224, %v2199
    %v2226 = vpop.permute.xlu0 %2225
    %2229 = vset.pattern.permute.xlu0 0
    %2230 = vperm.xlu0 %2229, %v2200
    %v2231 = vpop.permute.xlu0 %2230
    %2234 = vset.pattern.permute.xlu0 0
    %2235 = vperm.xlu0 %2234, %v2201
    %v2236 = vpop.permute.xlu0 %2235
    %2239 = vset.pattern.permute.xlu0 0
    %2240 = vperm.xlu0 %2239, %v2202
    %v2241 = vpop.permute.xlu0 %2240
    %2244 = vset.pattern.permute.xlu0 0
    %2245 = vperm.xlu0 %2244, %v2203
    %v2246 = vpop.permute.xlu0 %2245
    %2249 = vset.pattern.permute.xlu0 0
    %2250 = vperm.xlu0 %2249, %v2204
    %v2251 = vpop.permute.xlu0 %2250
    %2254 = vset.pattern.permute.xlu0 0
    %2255 = vperm.xlu0 %2254, %v2205
    %v2256 = vpop.permute.xlu0 %2255
    %2259 = vset.pattern.permute.xlu0 0
    %2260 = vperm.xlu0 %2259, %v2206
    %v2261 = vpop.permute.xlu0 %2260
    %2264 = vset.pattern.permute.xlu0 0
    %2265 = vperm.xlu0 %2264, %v2207
    %v2266 = vpop.permute.xlu0 %2265
    %2269 = vset.pattern.permute.xlu0 0
    %2270 = vperm.xlu0 %2269, %v2208
    %v2271 = vpop.permute.xlu0 %2270
    %2274 = vset.pattern.permute.xlu0 0
    %2275 = vperm.xlu0 %2274, %v2209
    %v2276 = vpop.permute.xlu0 %2275
    %2279 = vset.pattern.permute.xlu0 0
    %2280 = vperm.xlu0 %2279, %v2210
    %v2281 = vpop.permute.xlu0 %2280
    %2284 = vset.pattern.permute.xlu0 0
    %2285 = vperm.xlu0 %2284, %v2211
    %v2286 = vpop.permute.xlu0 %2285
    %2289 = vset.pattern.permute.xlu0 0
    %2290 = vperm.xlu0 %2289, %v2212
    %v2291 = vpop.permute.xlu0 %2290
    %v2309 = vunpack.c.l.b16 %v2181
    %v2310 = vunpack.c.h.b16 %v2181
    %v2311 = vunpack.c.l.b16 %v2182
    %v2312 = vunpack.c.h.b16 %v2182
    %v2313 = vunpack.c.l.b16 %v2183
    %v2314 = vunpack.c.h.b16 %v2183
    %v2315 = vunpack.c.l.b16 %v2184
    %v2316 = vunpack.c.h.b16 %v2184
    %v2317 = vunpack.c.l.b16 %v2185
    %v2318 = vunpack.c.h.b16 %v2185
    %v2319 = vunpack.c.l.b16 %v2186
    %v2320 = vunpack.c.h.b16 %v2186
    %v2321 = vunpack.c.l.b16 %v2187
    %v2322 = vunpack.c.h.b16 %v2187
    %v2323 = vunpack.c.l.b16 %v2188
    %v2324 = vunpack.c.h.b16 %v2188
    %v2325 = vunpack.c.l.b16 %v2189
    %v2326 = vunpack.c.h.b16 %v2189
    %v2327 = vunpack.c.l.b16 %v2190
    %v2328 = vunpack.c.h.b16 %v2190
    %v2329 = vunpack.c.l.b16 %v2191
    %v2330 = vunpack.c.h.b16 %v2191
    %v2331 = vunpack.c.l.b16 %v2192
    %v2332 = vunpack.c.h.b16 %v2192
    %v2333 = vunpack.c.l.b16 %v2193
    %v2334 = vunpack.c.h.b16 %v2193
    %v2335 = vunpack.c.l.b16 %v2194
    %v2336 = vunpack.c.h.b16 %v2194
    %v2337 = vunpack.c.l.b16 %v2195
    %v2338 = vunpack.c.h.b16 %v2195
    %v2339 = vunpack.c.l.b16 %v2196
    %v2340 = vunpack.c.h.b16 %v2196
    %v2341 = vpack.c.b16 %v2311, %v2309
    %v2342 = vpack.c.b16 %v2312, %v2310
    %v2343 = vpack.c.b16 %v2315, %v2313
    %v2344 = vpack.c.b16 %v2316, %v2314
    %v2345 = vpack.c.b16 %v2319, %v2317
    %v2346 = vpack.c.b16 %v2320, %v2318
    %v2347 = vpack.c.b16 %v2323, %v2321
    %v2348 = vpack.c.b16 %v2324, %v2322
    %v2349 = vpack.c.b16 %v2327, %v2325
    %v2350 = vpack.c.b16 %v2328, %v2326
    %v2351 = vpack.c.b16 %v2331, %v2329
    %v2352 = vpack.c.b16 %v2332, %v2330
    %v2353 = vpack.c.b16 %v2335, %v2333
    %v2354 = vpack.c.b16 %v2336, %v2334
    %v2355 = vpack.c.b16 %v2339, %v2337
    %v2356 = vpack.c.b16 %v2340, %v2338
    %2373 = vmatprep.subr.bf16.mxu0 0
    %2374 = vmatpush1.bf16.msra.mxu0 %v2172
    %2375 = vmatprep.subr.bf16.mxu0 0
    %2376 = vmatpush1.bf16.msra.mxu0 %v2171
    %2377 = vmatprep.subr.bf16.mxu0 0
    %2378 = vmatpush1.bf16.msra.mxu0 %v2170
    %2379 = vmatprep.subr.bf16.mxu0 0
    %2380 = vmatpush1.bf16.msra.mxu0 %v2169
    %2381 = vmatprep.subr.bf16.mxu0 0
    %2382 = vmatpush1.bf16.msra.mxu0 %v2168
    %2383 = vmatprep.subr.bf16.mxu0 0
    %2384 = vmatpush1.bf16.msra.mxu0 %v2167
    %2385 = vmatprep.subr.bf16.mxu0 0
    %2386 = vmatpush1.bf16.msra.mxu0 %v2166
    %2387 = vmatprep.subr.bf16.mxu0 0
    %2388 = vmatpush1.bf16.msra.mxu0 %v2165
    %2389 = vmatprep.subr.bf16.mxu0 0
    %2390 = vmatpush2.bf16.msra.mxu0 %v2180
    %2391 = vmatprep.subr.bf16.mxu0 0
    %2392 = vmatpush2.bf16.msra.mxu0 %v2179
    %2393 = vmatprep.subr.bf16.mxu0 0
    %2394 = vmatpush2.bf16.msra.mxu0 %v2178
    %2395 = vmatprep.subr.bf16.mxu0 0
    %2396 = vmatpush2.bf16.msra.mxu0 %v2177
    %2397 = vmatprep.subr.bf16.mxu0 0
    %2398 = vmatpush2.bf16.msra.mxu0 %v2176
    %2399 = vmatprep.subr.bf16.mxu0 0
    %2400 = vmatpush2.bf16.msra.mxu0 %v2175
    %2401 = vmatprep.subr.bf16.mxu0 0
    %2402 = vmatpush2.bf16.msra.mxu0 %v2174
    %2403 = vmatprep.subr.bf16.mxu0 0
    %2404 = vmatpush2.bf16.msra.mxu0 %v2173
    %2405 = vmatprep.mubr.bf16.mxu0 %v2342
    %2406 = vmatmul.mubr.bf16.gmra.mxu0 %v2341
    %v2407 = vpop.f32.mrf.mxu0
    %v2408 = vadd.f32 %v2216, %v2407
    %v2409 = vpop.f32.mrf.mxu0
    %v2410 = vpop.f32.mrf.mxu0
    %v2411 = vadd.f32 %v2221, %v2410
    %v2412 = vpop.f32.mrf.mxu0
    %2413 = vmatprep.mubr.bf16.mxu0 %v2344
    %2414 = vmatmul.mubr.bf16.gmra.mxu0 %v2343
    %v2415 = vpop.f32.mrf.mxu0
    %v2416 = vadd.f32 %v2226, %v2415
    %v2417 = vpop.f32.mrf.mxu0
    %v2418 = vpop.f32.mrf.mxu0
    %v2419 = vadd.f32 %v2231, %v2418
    %v2420 = vpop.f32.mrf.mxu0
    %2421 = vmatprep.mubr.bf16.mxu0 %v2346
    %2422 = vmatmul.mubr.bf16.gmra.mxu0 %v2345
    %v2423 = vpop.f32.mrf.mxu0
    %v2424 = vadd.f32 %v2236, %v2423
    %v2425 = vpop.f32.mrf.mxu0
    %v2426 = vpop.f32.mrf.mxu0
    %v2427 = vadd.f32 %v2241, %v2426
    %v2428 = vpop.f32.mrf.mxu0
    %2429 = vmatprep.mubr.bf16.mxu0 %v2348
    %2430 = vmatmul.mubr.bf16.gmra.mxu0 %v2347
    %v2431 = vpop.f32.mrf.mxu0
    %v2432 = vadd.f32 %v2246, %v2431
    %v2433 = vpop.f32.mrf.mxu0
    %v2434 = vpop.f32.mrf.mxu0
    %v2435 = vadd.f32 %v2251, %v2434
    %v2436 = vpop.f32.mrf.mxu0
    %2437 = vmatprep.mubr.bf16.mxu0 %v2350
    %2438 = vmatmul.mubr.bf16.gmra.mxu0 %v2349
    %v2439 = vpop.f32.mrf.mxu0
    %v2440 = vadd.f32 %v2256, %v2439
    %v2441 = vpop.f32.mrf.mxu0
    %v2442 = vpop.f32.mrf.mxu0
    %v2443 = vadd.f32 %v2261, %v2442
    %v2444 = vpop.f32.mrf.mxu0
    %2445 = vmatprep.mubr.bf16.mxu0 %v2352
    %2446 = vmatmul.mubr.bf16.gmra.mxu0 %v2351
    %v2447 = vpop.f32.mrf.mxu0
    %v2448 = vadd.f32 %v2266, %v2447
    %v2449 = vpop.f32.mrf.mxu0
    %v2450 = vpop.f32.mrf.mxu0
    %v2451 = vadd.f32 %v2271, %v2450
    %v2452 = vpop.f32.mrf.mxu0
    %2453 = vmatprep.mubr.bf16.mxu0 %v2354
    %2454 = vmatmul.mubr.bf16.gmra.mxu0 %v2353
    %v2455 = vpop.f32.mrf.mxu0
    %v2456 = vadd.f32 %v2276, %v2455
    %v2457 = vpop.f32.mrf.mxu0
    %v2458 = vpop.f32.mrf.mxu0
    %v2459 = vadd.f32 %v2281, %v2458
    %v2460 = vpop.f32.mrf.mxu0
    %2461 = vmatprep.mubr.bf16.mxu0 %v2356
    %2462 = vmatmul.mubr.bf16.gmra.mxu0 %v2355
    %v2463 = vpop.f32.mrf.mxu0
    %v2464 = vadd.f32 %v2286, %v2463
    %v2465 = vpop.f32.mrf.mxu0
    %v2466 = vpop.f32.mrf.mxu0
    %v2467 = vadd.f32 %v2291, %v2466
    %v2468 = vpop.f32.mrf.mxu0
    %2469 = vdwg.mxu0
    %v2470 = vmul.f32 %v2408, 0.01
    %v2471 = vmul.f32 %v2411, 0.01
    %v2472 = vmul.f32 %v2416, 0.01
    %v2473 = vmul.f32 %v2419, 0.01
    %v2474 = vmul.f32 %v2424, 0.01
    %v2475 = vmul.f32 %v2427, 0.01
    %v2476 = vmul.f32 %v2432, 0.01
    %v2477 = vmul.f32 %v2435, 0.01
    %v2478 = vmul.f32 %v2440, 0.01
    %v2479 = vmul.f32 %v2443, 0.01
    %v2480 = vmul.f32 %v2448, 0.01
    %v2481 = vmul.f32 %v2451, 0.01
    %v2482 = vmul.f32 %v2456, 0.01
    %v2483 = vmul.f32 %v2459, 0.01
    %v2484 = vmul.f32 %v2464, 0.01
    %v2485 = vmul.f32 %v2467, 0.01
    %v2486 = vmax.f32 %v2408, %v2470
    %v2487 = vmax.f32 %v2411, %v2471
    %v2488 = vmax.f32 %v2416, %v2472
    %v2489 = vmax.f32 %v2419, %v2473
    %v2490 = vmax.f32 %v2424, %v2474
    %v2491 = vmax.f32 %v2427, %v2475
    %v2492 = vmax.f32 %v2432, %v2476
    %v2493 = vmax.f32 %v2435, %v2477
    %v2494 = vmax.f32 %v2440, %v2478
    %v2495 = vmax.f32 %v2443, %v2479
    %v2496 = vmax.f32 %v2448, %v2480
    %v2497 = vmax.f32 %v2451, %v2481
    %v2498 = vmax.f32 %v2456, %v2482
    %v2499 = vmax.f32 %v2459, %v2483
    %v2500 = vmax.f32 %v2464, %v2484
    %v2501 = vmax.f32 %v2467, %v2485
    %v2502 = vpack.c.bf16 %v2487, %v2486
    %v2503 = vpack.c.bf16 %v2489, %v2488
    %v2504 = vpack.c.bf16 %v2491, %v2490
    %v2505 = vpack.c.bf16 %v2493, %v2492
    %v2506 = vpack.c.bf16 %v2495, %v2494
    %v2507 = vpack.c.bf16 %v2497, %v2496
    %v2508 = vpack.c.bf16 %v2499, %v2498
    %v2509 = vpack.c.bf16 %v2501, %v2500
    %v2510 = vld [vmem:[%s7] sm:$0xf]
    %v2511 = vld [vmem:[%s7 + $0x4] sm:$0xf]
    %v2512 = vld [vmem:[%s7 + $0x8] sm:$0xf]
    %v2513 = vld [vmem:[%s7 + $0xc] sm:$0xf]
    %v2514 = vld [vmem:[%s7 + $0x10] sm:$0xf]
    %v2515 = vld [vmem:[%s7 + $0x14] sm:$0xf]
    %v2516 = vld [vmem:[%s7 + $0x18] sm:$0xf]
    %v2517 = vld [vmem:[%s7 + $0x1c] sm:$0xf]
    %v2518 = vld [vmem:[%s8] sm:$0xff]
    %v2519 = vld [vmem:[%s8 + $0x8] sm:$0xff]
    %v2520 = vld [vmem:[%s8 + $0x10] sm:$0xff]
    %v2521 = vld [vmem:[%s8 + $0x18] sm:$0xff]
    %v2522 = vld [vmem:[%s8 + $0x20] sm:$0xff]
    %v2523 = vld [vmem:[%s8 + $0x28] sm:$0xff]
    %v2524 = vld [vmem:[%s8 + $0x30] sm:$0xff]
    %v2525 = vld [vmem:[%s8 + $0x38] sm:$0xff]
    %2527 = vset.pattern.permute.xlu0 0
    %2528 = vperm.xlu0 %2527, %v2518
    %v2529 = vpop.permute.xlu0 %2528
    %2532 = vset.pattern.permute.xlu0 0
    %2533 = vperm.xlu0 %2532, %v2519
    %v2534 = vpop.permute.xlu0 %2533
    %2537 = vset.pattern.permute.xlu0 0
    %2538 = vperm.xlu0 %2537, %v2520
    %v2539 = vpop.permute.xlu0 %2538
    %2542 = vset.pattern.permute.xlu0 0
    %2543 = vperm.xlu0 %2542, %v2521
    %v2544 = vpop.permute.xlu0 %2543
    %2547 = vset.pattern.permute.xlu0 0
    %2548 = vperm.xlu0 %2547, %v2522
    %v2549 = vpop.permute.xlu0 %2548
    %2552 = vset.pattern.permute.xlu0 0
    %2553 = vperm.xlu0 %2552, %v2523
    %v2554 = vpop.permute.xlu0 %2553
    %2557 = vset.pattern.permute.xlu0 0
    %2558 = vperm.xlu0 %2557, %v2524
    %v2559 = vpop.permute.xlu0 %2558
    %2562 = vset.pattern.permute.xlu0 0
    %2563 = vperm.xlu0 %2562, %v2525
    %v2564 = vpop.permute.xlu0 %2563
    %v2574 = vunpack.c.l.b16 %v2510
    %v2575 = vunpack.c.l.b16 %v2511
    %v2576 = vunpack.c.l.b16 %v2512
    %v2577 = vunpack.c.l.b16 %v2513
    %v2578 = vunpack.c.l.b16 %v2514
    %v2579 = vunpack.c.l.b16 %v2515
    %v2580 = vunpack.c.l.b16 %v2516
    %v2581 = vunpack.c.l.b16 %v2517
    %v2582 = vpack.c.b16 %v2575, %v2574
    %v2583 = vpack.c.b16 %v2577, %v2576
    %v2584 = vpack.c.b16 %v2579, %v2578
    %v2585 = vpack.c.b16 %v2581, %v2580
    %2590 = vmatprep.subr.bf16.mxu0 0
    %2591 = vmatpush1.bf16.msra.mxu0 %v2509
    %2592 = vmatprep.subr.bf16.mxu0 0
    %2593 = vmatpush1.bf16.msra.mxu0 %v2508
    %2594 = vmatprep.subr.bf16.mxu0 0
    %2595 = vmatpush1.bf16.msra.mxu0 %v2507
    %2596 = vmatprep.subr.bf16.mxu0 0
    %2597 = vmatpush1.bf16.msra.mxu0 %v2506
    %2598 = vmatprep.subr.bf16.mxu0 0
    %2599 = vmatpush1.bf16.msra.mxu0 %v2505
    %2600 = vmatprep.subr.bf16.mxu0 0
    %2601 = vmatpush1.bf16.msra.mxu0 %v2504
    %2602 = vmatprep.subr.bf16.mxu0 0
    %2603 = vmatpush1.bf16.msra.mxu0 %v2503
    %2604 = vmatprep.subr.bf16.mxu0 0
    %2605 = vmatpush1.bf16.msra.mxu0 %v2502
    %2606 = vmatprep.subr.bf16.mxu0 0
    %2607 = vmatpush2.bf16.msra.mxu0 0
    %2608 = vmatprep.subr.bf16.mxu0 0
    %2609 = vmatpush2.bf16.msra.mxu0 0
    %2610 = vmatprep.subr.bf16.mxu0 0
    %2611 = vmatpush2.bf16.msra.mxu0 0
    %2612 = vmatprep.subr.bf16.mxu0 0
    %2613 = vmatpush2.bf16.msra.mxu0 0
    %2614 = vmatprep.subr.bf16.mxu0 0
    %2615 = vmatpush2.bf16.msra.mxu0 0
    %2616 = vmatprep.subr.bf16.mxu0 0
    %2617 = vmatpush2.bf16.msra.mxu0 0
    %2618 = vmatprep.subr.bf16.mxu0 0
    %2619 = vmatpush2.bf16.msra.mxu0 0
    %2620 = vmatprep.subr.bf16.mxu0 0
    %2621 = vmatpush2.bf16.msra.mxu0 0
    %2622 = vmatprep.mubr.bf16.mxu0 0
    %2623 = vmatmul.mubr.bf16.gmra.mxu0 %v2582
    %v2624 = vpop.f32.mrf.mxu0
    %v2625 = vadd.f32 %v2529, %v2624
    %v2626 = vpop.f32.mrf.mxu0
    %v2627 = vpop.f32.mrf.mxu0
    %v2628 = vadd.f32 %v2534, %v2627
    %v2629 = vpop.f32.mrf.mxu0
    %2630 = vmatprep.mubr.bf16.mxu0 0
    %2631 = vmatmul.mubr.bf16.gmra.mxu0 %v2583
    %v2632 = vpop.f32.mrf.mxu0
    %v2633 = vadd.f32 %v2539, %v2632
    %v2634 = vpop.f32.mrf.mxu0
    %v2635 = vpop.f32.mrf.mxu0
    %v2636 = vadd.f32 %v2544, %v2635
    %v2637 = vpop.f32.mrf.mxu0
    %2638 = vmatprep.mubr.bf16.mxu0 0
    %2639 = vmatmul.mubr.bf16.gmra.mxu0 %v2584
    %v2640 = vpop.f32.mrf.mxu0
    %v2641 = vadd.f32 %v2549, %v2640
    %v2642 = vpop.f32.mrf.mxu0
    %v2643 = vpop.f32.mrf.mxu0
    %v2644 = vadd.f32 %v2554, %v2643
    %v2645 = vpop.f32.mrf.mxu0
    %2646 = vmatprep.mubr.bf16.mxu0 0
    %2647 = vmatmul.mubr.bf16.gmra.mxu0 %v2585
    %v2648 = vpop.f32.mrf.mxu0
    %v2649 = vadd.f32 %v2559, %v2648
    %v2650 = vpop.f32.mrf.mxu0
    %v2651 = vpop.f32.mrf.mxu0
    %v2652 = vadd.f32 %v2564, %v2651
    %v2653 = vpop.f32.mrf.mxu0
    %2654 = vdwg.mxu0
    %v2655 = vmul.f32 %v2625, 0.01
    %v2656 = vmul.f32 %v2628, 0.01
    %v2657 = vmul.f32 %v2633, 0.01
    %v2658 = vmul.f32 %v2636, 0.01
    %v2659 = vmul.f32 %v2641, 0.01
    %v2660 = vmul.f32 %v2644, 0.01
    %v2661 = vmul.f32 %v2649, 0.01
    %v2662 = vmul.f32 %v2652, 0.01
    %v2663 = vmax.f32 %v2625, %v2655
    %v2664 = vmax.f32 %v2628, %v2656
    %v2665 = vmax.f32 %v2633, %v2657
    %v2666 = vmax.f32 %v2636, %v2658
    %v2667 = vmax.f32 %v2641, %v2659
    %v2668 = vmax.f32 %v2644, %v2660
    %v2669 = vmax.f32 %v2649, %v2661
    %v2670 = vmax.f32 %v2652, %v2662
    %v2671 = vld [vmem:[%s9] sm:$0xff]
    %v2672 = vld [vmem:[%s9 + $0x8] sm:$0xff]
    %v2673 = vld [vmem:[%s9 + $0x10] sm:$0xff]
    %v2674 = vld [vmem:[%s9 + $0x18] sm:$0xff]
    %v2675 = vld [vmem:[%s9 + $0x20] sm:$0xff]
    %v2676 = vld [vmem:[%s9 + $0x28] sm:$0xff]
    %v2677 = vld [vmem:[%s9 + $0x30] sm:$0xff]
    %v2678 = vld [vmem:[%s9 + $0x38] sm:$0xff]
    %2680 = vset.pattern.permute.xlu0 0
    %2681 = vperm.xlu0 %2680, %v2671
    %v2682 = vpop.permute.xlu0 %2681
    %2685 = vset.pattern.permute.xlu0 0
    %2686 = vperm.xlu0 %2685, %v2672
    %v2687 = vpop.permute.xlu0 %2686
    %2690 = vset.pattern.permute.xlu0 0
    %2691 = vperm.xlu0 %2690, %v2673
    %v2692 = vpop.permute.xlu0 %2691
    %2695 = vset.pattern.permute.xlu0 0
    %2696 = vperm.xlu0 %2695, %v2674
    %v2697 = vpop.permute.xlu0 %2696
    %2700 = vset.pattern.permute.xlu0 0
    %2701 = vperm.xlu0 %2700, %v2675
    %v2702 = vpop.permute.xlu0 %2701
    %2705 = vset.pattern.permute.xlu0 0
    %2706 = vperm.xlu0 %2705, %v2676
    %v2707 = vpop.permute.xlu0 %2706
    %2710 = vset.pattern.permute.xlu0 0
    %2711 = vperm.xlu0 %2710, %v2677
    %v2712 = vpop.permute.xlu0 %2711
    %2715 = vset.pattern.permute.xlu0 0
    %2716 = vperm.xlu0 %2715, %v2678
    %v2717 = vpop.permute.xlu0 %2716
    %v2719 = vmul.f32 %v2663, %v2682
    %v2720 = vmul.f32 %v2664, %v2687
    %v2721 = vmul.f32 %v2665, %v2692
    %v2722 = vmul.f32 %v2666, %v2697
    %v2723 = vmul.f32 %v2667, %v2702
    %v2724 = vmul.f32 %v2668, %v2707
    %v2725 = vmul.f32 %v2669, %v2712
    %v2726 = vmul.f32 %v2670, %v2717
    %v2727 = vadd.f32 %v2719, %v2720
    %v2728 = vadd.f32 %v2727, %v2721
    %v2729 = vadd.f32 %v2728, %v2722
    %v2730 = vadd.f32 %v2729, %v2723
    %v2731 = vadd.f32 %v2730, %v2724
    %v2732 = vadd.f32 %v2731, %v2725
    %v2733 = vadd.f32 %v2732, %v2726
    %v2734 = vrot.slane %v2733, 4
    %v2735 = vadd.f32 %v2733, %v2734
    %v2736 = vrot.slane %v2735, 2
    %v2737 = vadd.f32 %v2735, %v2736
    %v2738 = vrot.slane %v2737, 1
    %v2739 = vadd.f32 %v2737, %v2738
    %s2740 = sld [smem:[#allocation2]]
    %v2741 = vstv %s2740
    %v2742 = vadd.f32 %v2739, %v2741
    %v2743 = vsub.f32 0.0, %v2742
    %v2744 = vmul.f32 %v2743, 1.442695
    %v2745 = vpow.pop %v2744
    %v2746 = vadd.f32 %v2745, 1.0
    %v2747 = vrcp.pop %v2746
    %2748 = vst [vmem:[#allocation3] sm:$0x1] %v2747
    // Predicated region
    $region46: #{tpu_custom_call.1} parent=1 // pred_check
      _
    $region47: #{tpu_custom_call.1} parent=1 // pred_check_branch
      %2750 = sbr.rel (0) target = $region49
    $region48: #{tpu_custom_call.1} parent=1 // pred_region
      %s2752 = ssub.s32 16, 16
      %2753 = vsyncadd [#allocation4], %s2752
      %s2755 = sshll.u32 [#allocation3], 4
      %s2756 = int_to_ptr.vmem [resolvable:$true] %s2755
      %2758 = dma.vmem_to_hbm [thread:$0]  %s2756, 16, %s11, [#allocation4]
    $region49: #{tpu_custom_call.1} parent=1 // pred_fallthru
      _
    // Predicated region
    $region50: #{tpu_custom_call.1} parent=1 // pred_check
      _
    $region51: #{tpu_custom_call.1} parent=1 // pred_check_branch
      %2760 = sbr.rel (0) target = $region53
    $region52: #{tpu_custom_call.1} parent=1 // pred_region
      %2761 = dma.done [#allocation4], 16
    $region53: #{tpu_custom_call.1} parent=1 // pred_fallthru
      _
    %2762 = vsyncpa [#allocation4], 1

</llo_original>
